<compile_context>
chip_gen: v7x
topology: tpu7x:2x2x1
jax: 0.10.0
libtpu: 0.0.40
codegen_flags: <defaults>
</compile_context>

<pallas_src>
import functools
import math

import jax
import jax.numpy as jnp
from jax import lax
from jax.experimental import pallas as pl
from jax.experimental.pallas import tpu as pltpu

LANE = 128


def _round_up(x, m):
    return (x + m - 1) // m * m


def mha_kernel(xq_ref, xk_ref, xv_ref,
               wq_ref, wk_ref, wv_ref,
               bq_ref, bk_ref, bv_ref,
               wo_ref, bo_ref, bias_ref,
               out_ref, *, num_heads):
    # Shapes (single grid step, batch folded into sublanes; R = B*S):
    #   xq/xk/xv : (R, D)
    #   wq/wk/wv : (D, H*128)   head h occupies lanes [h*128, h*128+d_k), rest zero,
    #                            1/sqrt(d_k) already folded into wq/bq
    #   bq/bk/bv : (1, H*128)
    #   wo       : (H*128, 128) per-head block rows of W_o^T, zero-padded
    #   bo       : (1, 128)
    #   bias     : (R, R)       0 inside a batch's block (where allowed), -1e9 elsewhere
    #   out      : (R, 128)     lane-dense slab; wrapper slices back to D
    rows = out_ref.shape[0]
    n_out = out_ref.shape[1]

    # Three accumulated MXU passes (K = D, N = H*128); no wrapper-side concat needed.
    q_all = jnp.dot(xq_ref[...], wq_ref[...],
                    preferred_element_type=jnp.float32) + bq_ref[...]
    k_all = jnp.dot(xk_ref[...], wk_ref[...],
                    preferred_element_type=jnp.float32) + bk_ref[...]
    v_all = jnp.dot(xv_ref[...], wv_ref[...],
                    preferred_element_type=jnp.float32) + bv_ref[...]

    wo = wo_ref[...]          # hoisted
    bias = bias_ref[...]      # hoisted

    acc = jnp.zeros((rows, n_out), jnp.float32)
    for h in range(num_heads):
        lo = h * LANE
        # 128-lane-aligned, full-vreg views — no lane relayout.
        qh = q_all[:, lo:lo + LANE]
        kh = k_all[:, lo:lo + LANE]
        vh = v_all[:, lo:lo + LANE]

        # NT matmul (contract last dims of both) — no explicit transpose of kh.
        # Zero-padded lanes beyond d_k contribute nothing; scale already in qh.
        scores = lax.dot_general(
            qh, kh, dimension_numbers=(((1,), (1,)), ((), ())),
            preferred_element_type=jnp.float32) + bias

        # Numerically-stable softmax; normalization via EUP approx reciprocal.
        scores = scores - jnp.max(scores, axis=-1, keepdims=True)
        e = jnp.exp(scores)
        probs = e * pl.reciprocal(jnp.sum(e, axis=-1, keepdims=True), approx=True)

        head_out = jnp.dot(probs, vh, preferred_element_type=jnp.float32)

        # combine_heads + W_o fused: accumulate against this head's block row of W_o.
        acc = acc + jnp.dot(head_out, wo[lo:lo + LANE, :],
                            preferred_element_type=jnp.float32)

    out_ref[...] = (acc + bo_ref[...]).astype(out_ref.dtype)


def fuse_mha_params(params, num_heads, d_model):
    """Build the packed/padded weights ONCE at init time (review item: hoist weight fusion
    out of the per-call path).  params follow nn.Linear layout: W_* (out, in), b_* (out,)."""
    d_k = d_model // num_heads
    scale = 1.0 / math.sqrt(d_k)
    n_cols = num_heads * LANE
    n_out = _round_up(d_model, LANE)

    def pack_proj(w, b, s):
        wt = w.T.astype(jnp.float32) * s
        bs = b.astype(jnp.float32) * s
        wp = jnp.zeros((d_model, n_cols), jnp.float32)
        bp = jnp.zeros((1, n_cols), jnp.float32)
        for h in range(num_heads):
            wp = wp.at[:, h * LANE:h * LANE + d_k].set(wt[:, h * d_k:(h + 1) * d_k])
            bp = bp.at[0, h * LANE:h * LANE + d_k].set(bs[h * d_k:(h + 1) * d_k])
        return wp, bp

    wq, bq = pack_proj(params["W_q"], params["b_q"], scale)   # scale folded into Q path
    wk, bk = pack_proj(params["W_k"], params["b_k"], 1.0)
    wv, bv = pack_proj(params["W_v"], params["b_v"], 1.0)

    wot = params["W_o"].T.astype(jnp.float32)                 # (in=D, out=D)
    wo = jnp.zeros((n_cols, n_out), jnp.float32)
    for h in range(num_heads):
        wo = wo.at[h * LANE:h * LANE + d_k, :d_model].set(wot[h * d_k:(h + 1) * d_k, :])
    bo = jnp.zeros((1, n_out), jnp.float32).at[0, :d_model].set(
        params["b_o"].astype(jnp.float32))

    return dict(wq=wq, wk=wk, wv=wv, bq=bq, bk=bk, bv=bv, wo=wo, bo=bo,
                num_heads=num_heads, d_model=d_model, d_k=d_k, n_out=n_out,
                n_cols=n_cols)


def build_attn_bias(B, S, mask=None):
    """Additive bias over the batch-folded (B*S, B*S) score tile: 0 where attention is
    allowed (same batch AND mask != 0), -1e9 elsewhere (matches torch masked_fill)."""
    if mask is None:
        allowed = jnp.ones((B, S, S), dtype=bool)
    else:
        allowed = jnp.broadcast_to(jnp.asarray(mask) != 0, (B, S, S))
    bias = jnp.full((B * S, B * S), -1e9, jnp.float32)
    for b in range(B):
        bias = bias.at[b * S:(b + 1) * S, b * S:(b + 1) * S].set(
            jnp.where(allowed[b], 0.0, -1e9))
    return bias


def multi_head_attention(Q, K, V, fused, mask=None):
    """Q/K/V: (B, S, D).  `fused` comes from fuse_mha_params (built once at init).
    `mask`: optional, broadcastable to (B, S, S); nonzero = attend (torch semantics)."""
    B, S, D = Q.shape
    num_heads = fused["num_heads"]
    n_cols = fused["n_cols"]
    n_out = fused["n_out"]
    rows = B * S
    dtype = Q.dtype

    # Batch folded into sublanes: single grid step over (B*S, ·) rows.
    xq = Q.reshape(rows, D)
    xk = K.reshape(rows, D)
    xv = V.reshape(rows, D)
    bias = build_attn_bias(B, S, mask)

    kernel = functools.partial(mha_kernel, num_heads=num_heads)

    def full_spec(shape):
        return pl.BlockSpec(shape, lambda i, _s=shape: tuple(0 for _ in _s))

    out_padded = pl.pallas_call(
        kernel,
        out_shape=jax.ShapeDtypeStruct((rows, n_out), dtype),
        grid_spec=pltpu.PrefetchScalarGridSpec(
            num_scalar_prefetch=0,
            grid=(1,),
            in_specs=[
                full_spec((rows, D)), full_spec((rows, D)), full_spec((rows, D)),
                full_spec((D, n_cols)), full_spec((D, n_cols)), full_spec((D, n_cols)),
                full_spec((1, n_cols)), full_spec((1, n_cols)), full_spec((1, n_cols)),
                full_spec((n_cols, n_out)), full_spec((1, n_out)),
                full_spec((rows, rows)),
            ],
            out_specs=full_spec((rows, n_out)),
        ),
        compiler_params=pltpu.CompilerParams(
            dimension_semantics=("arbitrary",)),
    )(xq, xk, xv,
      fused["wq"], fused["wk"], fused["wv"],
      fused["bq"], fused["bk"], fused["bv"],
      fused["wo"], fused["bo"], bias)

    return out_padded[:, :D].reshape(B, S, D)


def ref_multi_head_attention(Q, K, V, params, num_heads, mask=None):
    """Pure-JAX reference mirroring the PyTorch MultiHeadAttention exactly."""
    B, S, D = Q.shape
    d_k = D // num_heads

    def linear(x, w, b):
        return jnp.einsum("bsd,ed->bse", x, w) + b

    def split_heads(x):
        return x.reshape(B, S, num_heads, d_k).transpose(0, 2, 1, 3)

    q = split_heads(linear(Q, params["W_q"], params["b_q"]))
    k = split_heads(linear(K, params["W_k"], params["b_k"]))
    v = split_heads(linear(V, params["W_v"], params["b_v"]))
    scores = jnp.einsum("bhqd,bhkd->bhqk", q, k) / math.sqrt(d_k)
    if mask is not None:
        m = jnp.broadcast_to(jnp.asarray(mask) != 0, (B, S, S))
        scores = jnp.where(m[:, None, :, :], scores, -1e9)
    probs = jax.nn.softmax(scores, axis=-1)
    attn = jnp.einsum("bhqk,bhkd->bhqd", probs, v)
    attn = attn.transpose(0, 2, 1, 3).reshape(B, S, D)
    return linear(attn, params["W_o"], params["b_o"])


if __name__ == "__main__":
    d_model = 32
    num_heads = 4
    batch = 2
    seq = 8

    key = jax.random.PRNGKey(0)
    keys = jax.random.split(key, 12)

    # Deterministic nn.Linear-style init: U(-1/sqrt(d_model), 1/sqrt(d_model))
    bound = 1.0 / math.sqrt(d_model)
    params = {
        "W_q": jax.random.uniform(keys[0], (d_model, d_model), jnp.float32, -bound, bound),
        "b_q": jax.random.uniform(keys[1], (d_model,), jnp.float32, -bound, bound),
        "W_k": jax.random.uniform(keys[2], (d_model, d_model), jnp.float32, -bound, bound),
        "b_k": jax.random.uniform(keys[3], (d_model,), jnp.float32, -bound, bound),
        "W_v": jax.random.uniform(keys[4], (d_model, d_model), jnp.float32, -bound, bound),
        "b_v": jax.random.uniform(keys[5], (d_model,), jnp.float32, -bound, bound),
        "W_o": jax.random.uniform(keys[6], (d_model, d_model), jnp.float32, -bound, bound),
        "b_o": jax.random.uniform(keys[7], (d_model,), jnp.float32, -bound, bound),
    }

    Q = jax.random.normal(keys[8], (batch, seq, d_model), jnp.float32)
    K = jax.random.normal(keys[9], (batch, seq, d_model), jnp.float32)
    V = jax.random.normal(keys[10], (batch, seq, d_model), jnp.float32)

    # Weight fusion/padding happens ONCE (init time), not per attention call.
    fused = fuse_mha_params(params, num_heads, d_model)

    # 1) Unmasked (encoder self-attention / cross-attention with no padding).
    out = jax.block_until_ready(multi_head_attention(Q, K, V, fused))
    ref = ref_multi_head_attention(Q, K, V, params, num_heads)
    assert out.shape == (batch, seq, d_model)
    # Tolerance 2e-3: softmax normalization uses the EUP approximate reciprocal;
    # everything else is exact f32.
    assert jnp.allclose(out, ref, atol=2e-3, rtol=2e-3), "Pallas output mismatch (no mask)"

    # 2) Causal mask (decoder self-attention path of the Transformer).
    causal = jnp.tril(jnp.ones((seq, seq), jnp.int32))[None]   # (1, S, S), broadcasts over B
    out_m = jax.block_until_ready(multi_head_attention(Q, Q, Q, fused, mask=causal))
    ref_m = ref_multi_head_attention(Q, Q, Q, params, num_heads, mask=causal)
    assert jnp.allclose(out_m, ref_m, atol=2e-3, rtol=2e-3), "Pallas output mismatch (causal mask)"

    print("KERNEL_OK")
</pallas_src>

<mosaic_0001>
module attributes {stable_mosaic.version = 11 : i64} {
  func.func @mha_kernel(%arg0: i32, %arg1: memref<16x32xf32, #tpu.memory_space<vmem>>, %arg2: memref<16x32xf32, #tpu.memory_space<vmem>>, %arg3: memref<16x32xf32, #tpu.memory_space<vmem>>, %arg4: memref<32x512xf32, #tpu.memory_space<vmem>>, %arg5: memref<32x512xf32, #tpu.memory_space<vmem>>, %arg6: memref<32x512xf32, #tpu.memory_space<vmem>>, %arg7: memref<1x512xf32, #tpu.memory_space<vmem>>, %arg8: memref<1x512xf32, #tpu.memory_space<vmem>>, %arg9: memref<1x512xf32, #tpu.memory_space<vmem>>, %arg10: memref<512x128xf32, #tpu.memory_space<vmem>>, %arg11: memref<1x128xf32, #tpu.memory_space<vmem>>, %arg12: memref<16x16xf32, #tpu.memory_space<vmem>>, %arg13: memref<16x128xf32, #tpu.memory_space<vmem>>) attributes {dimension_semantics = [#tpu.dimension_semantics<arbitrary>], iteration_bounds = array<i64: 1>, scalar_prefetch = 0 : i64, scratch_operands = 0 : i64, tpu.core_type = #tpu.core_type<tc>, window_params = [{pipeline_mode = #tpu.pipeline_mode<synchronous>, transform_indices = @transform_0, window_bounds = array<i64: 16, 32>}, {pipeline_mode = #tpu.pipeline_mode<synchronous>, transform_indices = @transform_1, window_bounds = array<i64: 16, 32>}, {pipeline_mode = #tpu.pipeline_mode<synchronous>, transform_indices = @transform_2, window_bounds = array<i64: 16, 32>}, {pipeline_mode = #tpu.pipeline_mode<synchronous>, transform_indices = @transform_3, window_bounds = array<i64: 32, 512>}, {pipeline_mode = #tpu.pipeline_mode<synchronous>, transform_indices = @transform_4, window_bounds = array<i64: 32, 512>}, {pipeline_mode = #tpu.pipeline_mode<synchronous>, transform_indices = @transform_5, window_bounds = array<i64: 32, 512>}, {pipeline_mode = #tpu.pipeline_mode<synchronous>, transform_indices = @transform_6, window_bounds = array<i64: 1, 512>}, {pipeline_mode = #tpu.pipeline_mode<synchronous>, transform_indices = @transform_7, window_bounds = array<i64: 1, 512>}, {pipeline_mode = #tpu.pipeline_mode<synchronous>, transform_indices = @transform_8, window_bounds = array<i64: 1, 512>}, {pipeline_mode = #tpu.pipeline_mode<synchronous>, transform_indices = @transform_9, window_bounds = array<i64: 512, 128>}, {pipeline_mode = #tpu.pipeline_mode<synchronous>, transform_indices = @transform_10, window_bounds = array<i64: 1, 128>}, {pipeline_mode = #tpu.pipeline_mode<synchronous>, transform_indices = @transform_11, window_bounds = array<i64: 16, 16>}, {pipeline_mode = #tpu.pipeline_mode<synchronous>, transform_indices = @transform_12, window_bounds = array<i64: 16, 128>}]} {
    %c0 = arith.constant 0 : index
    %c0_0 = arith.constant 0 : index
    %0 = vector.load %arg1[%c0, %c0_0] : memref<16x32xf32, #tpu.memory_space<vmem>>, vector<16x32xf32>
    %c0_1 = arith.constant 0 : index
    %c0_2 = arith.constant 0 : index
    %1 = vector.load %arg4[%c0_1, %c0_2] : memref<32x512xf32, #tpu.memory_space<vmem>>, vector<32x512xf32>
    %cst = arith.constant dense<0.000000e+00> : vector<16x512xf32>
    %2 = tpu.matmul %0, %1, %cst {dimension_numbers = #tpu.dot_dimension_numbers<[1], [0], [0], [1], [0, 0, 1, 1], [], []>} : vector<16x32xf32>, vector<32x512xf32>, vector<16x512xf32> -> vector<16x512xf32>
    %c0_3 = arith.constant 0 : index
    %c0_4 = arith.constant 0 : index
    %3 = vector.load %arg7[%c0_3, %c0_4] : memref<1x512xf32, #tpu.memory_space<vmem>>, vector<1x512xf32>
    %4 = vector.broadcast %3 : vector<1x512xf32> to vector<16x512xf32>
    %5 = arith.addf %2, %4 : vector<16x512xf32>
    %c0_5 = arith.constant 0 : index
    %c0_6 = arith.constant 0 : index
    %6 = vector.load %arg2[%c0_5, %c0_6] : memref<16x32xf32, #tpu.memory_space<vmem>>, vector<16x32xf32>
    %c0_7 = arith.constant 0 : index
    %c0_8 = arith.constant 0 : index
    %7 = vector.load %arg5[%c0_7, %c0_8] : memref<32x512xf32, #tpu.memory_space<vmem>>, vector<32x512xf32>
    %cst_9 = arith.constant dense<0.000000e+00> : vector<16x512xf32>
    %8 = tpu.matmul %6, %7, %cst_9 {dimension_numbers = #tpu.dot_dimension_numbers<[1], [0], [0], [1], [0, 0, 1, 1], [], []>} : vector<16x32xf32>, vector<32x512xf32>, vector<16x512xf32> -> vector<16x512xf32>
    %c0_10 = arith.constant 0 : index
    %c0_11 = arith.constant 0 : index
    %9 = vector.load %arg8[%c0_10, %c0_11] : memref<1x512xf32, #tpu.memory_space<vmem>>, vector<1x512xf32>
    %10 = vector.broadcast %9 : vector<1x512xf32> to vector<16x512xf32>
    %11 = arith.addf %8, %10 : vector<16x512xf32>
    %c0_12 = arith.constant 0 : index
    %c0_13 = arith.constant 0 : index
    %12 = vector.load %arg3[%c0_12, %c0_13] : memref<16x32xf32, #tpu.memory_space<vmem>>, vector<16x32xf32>
    %c0_14 = arith.constant 0 : index
    %c0_15 = arith.constant 0 : index
    %13 = vector.load %arg6[%c0_14, %c0_15] : memref<32x512xf32, #tpu.memory_space<vmem>>, vector<32x512xf32>
    %cst_16 = arith.constant dense<0.000000e+00> : vector<16x512xf32>
    %14 = tpu.matmul %12, %13, %cst_16 {dimension_numbers = #tpu.dot_dimension_numbers<[1], [0], [0], [1], [0, 0, 1, 1], [], []>} : vector<16x32xf32>, vector<32x512xf32>, vector<16x512xf32> -> vector<16x512xf32>
    %c0_17 = arith.constant 0 : index
    %c0_18 = arith.constant 0 : index
    %15 = vector.load %arg9[%c0_17, %c0_18] : memref<1x512xf32, #tpu.memory_space<vmem>>, vector<1x512xf32>
    %16 = vector.broadcast %15 : vector<1x512xf32> to vector<16x512xf32>
    %17 = arith.addf %14, %16 : vector<16x512xf32>
    %c0_19 = arith.constant 0 : index
    %c0_20 = arith.constant 0 : index
    %18 = vector.load %arg10[%c0_19, %c0_20] : memref<512x128xf32, #tpu.memory_space<vmem>>, vector<512x128xf32>
    %c0_21 = arith.constant 0 : index
    %c0_22 = arith.constant 0 : index
    %19 = vector.load %arg12[%c0_21, %c0_22] : memref<16x16xf32, #tpu.memory_space<vmem>>, vector<16x16xf32>
    %cst_23 = arith.constant 0.000000e+00 : f32
    %20 = vector.broadcast %cst_23 : f32 to vector<16x128xf32>
    %21 = vector.extract_strided_slice %5 {offsets = [0, 0], sizes = [16, 128], strides = [1, 1]} : vector<16x512xf32> to vector<16x128xf32>
    %22 = vector.extract_strided_slice %11 {offsets = [0, 0], sizes = [16, 128], strides = [1, 1]} : vector<16x512xf32> to vector<16x128xf32>
    %23 = vector.extract_strided_slice %17 {offsets = [0, 0], sizes = [16, 128], strides = [1, 1]} : vector<16x512xf32> to vector<16x128xf32>
    %cst_24 = arith.constant dense<0.000000e+00> : vector<16x16xf32>
    %24 = tpu.matmul %21, %22, %cst_24 {dimension_numbers = #tpu.dot_dimension_numbers<[1], [1], [0], [0], [0, 0, 1, 0], [], []>} : vector<16x128xf32>, vector<16x128xf32>, vector<16x16xf32> -> vector<16x16xf32>
    %25 = arith.addf %24, %19 : vector<16x16xf32>
    %cst_25 = arith.constant dense<0xFF800000> : vector<16xf32>
    %26 = vector.multi_reduction <maximumf>, %25, %cst_25 [1] : vector<16x16xf32> to vector<16xf32>
    %27 = vector.shape_cast %26 : vector<16xf32> to vector<16x1xf32>
    %28 = vector.broadcast %27 : vector<16x1xf32> to vector<16x16xf32>
    %29 = arith.subf %25, %28 : vector<16x16xf32>
    %30 = math.exp %29 : vector<16x16xf32>
    %cst_26 = arith.constant dense<0.000000e+00> : vector<16xf32>
    %31 = vector.multi_reduction <add>, %30, %cst_26 [1] : vector<16x16xf32> to vector<16xf32>
    %32 = vector.shape_cast %31 : vector<16xf32> to vector<16x1xf32>
    %33 = tpu.reciprocal %32 {approx = true} : vector<16x1xf32> -> vector<16x1xf32>
    %34 = vector.broadcast %33 : vector<16x1xf32> to vector<16x16xf32>
    %35 = arith.mulf %30, %34 : vector<16x16xf32>
    %cst_27 = arith.constant dense<0.000000e+00> : vector<16x128xf32>
    %36 = tpu.matmul %35, %23, %cst_27 {dimension_numbers = #tpu.dot_dimension_numbers<[1], [0], [0], [1], [0, 0, 1, 1], [], []>} : vector<16x16xf32>, vector<16x128xf32>, vector<16x128xf32> -> vector<16x128xf32>
    %37 = vector.extract_strided_slice %18 {offsets = [0, 0], sizes = [128, 128], strides = [1, 1]} : vector<512x128xf32> to vector<128x128xf32>
    %cst_28 = arith.constant dense<0.000000e+00> : vector<16x128xf32>
    %38 = tpu.matmul %36, %37, %cst_28 {dimension_numbers = #tpu.dot_dimension_numbers<[1], [0], [0], [1], [0, 0, 1, 1], [], []>} : vector<16x128xf32>, vector<128x128xf32>, vector<16x128xf32> -> vector<16x128xf32>
    %39 = arith.addf %20, %38 : vector<16x128xf32>
    %40 = vector.extract_strided_slice %5 {offsets = [0, 128], sizes = [16, 128], strides = [1, 1]} : vector<16x512xf32> to vector<16x128xf32>
    %41 = vector.extract_strided_slice %11 {offsets = [0, 128], sizes = [16, 128], strides = [1, 1]} : vector<16x512xf32> to vector<16x128xf32>
    %42 = vector.extract_strided_slice %17 {offsets = [0, 128], sizes = [16, 128], strides = [1, 1]} : vector<16x512xf32> to vector<16x128xf32>
    %cst_29 = arith.constant dense<0.000000e+00> : vector<16x16xf32>
    %43 = tpu.matmul %40, %41, %cst_29 {dimension_numbers = #tpu.dot_dimension_numbers<[1], [1], [0], [0], [0, 0, 1, 0], [], []>} : vector<16x128xf32>, vector<16x128xf32>, vector<16x16xf32> -> vector<16x16xf32>
    %44 = arith.addf %43, %19 : vector<16x16xf32>
    %cst_30 = arith.constant dense<0xFF800000> : vector<16xf32>
    %45 = vector.multi_reduction <maximumf>, %44, %cst_30 [1] : vector<16x16xf32> to vector<16xf32>
    %46 = vector.shape_cast %45 : vector<16xf32> to vector<16x1xf32>
    %47 = vector.broadcast %46 : vector<16x1xf32> to vector<16x16xf32>
    %48 = arith.subf %44, %47 : vector<16x16xf32>
    %49 = math.exp %48 : vector<16x16xf32>
    %cst_31 = arith.constant dense<0.000000e+00> : vector<16xf32>
    %50 = vector.multi_reduction <add>, %49, %cst_31 [1] : vector<16x16xf32> to vector<16xf32>
    %51 = vector.shape_cast %50 : vector<16xf32> to vector<16x1xf32>
    %52 = tpu.reciprocal %51 {approx = true} : vector<16x1xf32> -> vector<16x1xf32>
    %53 = vector.broadcast %52 : vector<16x1xf32> to vector<16x16xf32>
    %54 = arith.mulf %49, %53 : vector<16x16xf32>
    %cst_32 = arith.constant dense<0.000000e+00> : vector<16x128xf32>
    %55 = tpu.matmul %54, %42, %cst_32 {dimension_numbers = #tpu.dot_dimension_numbers<[1], [0], [0], [1], [0, 0, 1, 1], [], []>} : vector<16x16xf32>, vector<16x128xf32>, vector<16x128xf32> -> vector<16x128xf32>
    %56 = vector.extract_strided_slice %18 {offsets = [128, 0], sizes = [128, 128], strides = [1, 1]} : vector<512x128xf32> to vector<128x128xf32>
    %cst_33 = arith.constant dense<0.000000e+00> : vector<16x128xf32>
    %57 = tpu.matmul %55, %56, %cst_33 {dimension_numbers = #tpu.dot_dimension_numbers<[1], [0], [0], [1], [0, 0, 1, 1], [], []>} : vector<16x128xf32>, vector<128x128xf32>, vector<16x128xf32> -> vector<16x128xf32>
    %58 = arith.addf %39, %57 : vector<16x128xf32>
    %59 = vector.extract_strided_slice %5 {offsets = [0, 256], sizes = [16, 128], strides = [1, 1]} : vector<16x512xf32> to vector<16x128xf32>
    %60 = vector.extract_strided_slice %11 {offsets = [0, 256], sizes = [16, 128], strides = [1, 1]} : vector<16x512xf32> to vector<16x128xf32>
    %61 = vector.extract_strided_slice %17 {offsets = [0, 256], sizes = [16, 128], strides = [1, 1]} : vector<16x512xf32> to vector<16x128xf32>
    %cst_34 = arith.constant dense<0.000000e+00> : vector<16x16xf32>
    %62 = tpu.matmul %59, %60, %cst_34 {dimension_numbers = #tpu.dot_dimension_numbers<[1], [1], [0], [0], [0, 0, 1, 0], [], []>} : vector<16x128xf32>, vector<16x128xf32>, vector<16x16xf32> -> vector<16x16xf32>
    %63 = arith.addf %62, %19 : vector<16x16xf32>
    %cst_35 = arith.constant dense<0xFF800000> : vector<16xf32>
    %64 = vector.multi_reduction <maximumf>, %63, %cst_35 [1] : vector<16x16xf32> to vector<16xf32>
    %65 = vector.shape_cast %64 : vector<16xf32> to vector<16x1xf32>
    %66 = vector.broadcast %65 : vector<16x1xf32> to vector<16x16xf32>
    %67 = arith.subf %63, %66 : vector<16x16xf32>
    %68 = math.exp %67 : vector<16x16xf32>
    %cst_36 = arith.constant dense<0.000000e+00> : vector<16xf32>
    %69 = vector.multi_reduction <add>, %68, %cst_36 [1] : vector<16x16xf32> to vector<16xf32>
    %70 = vector.shape_cast %69 : vector<16xf32> to vector<16x1xf32>
    %71 = tpu.reciprocal %70 {approx = true} : vector<16x1xf32> -> vector<16x1xf32>
    %72 = vector.broadcast %71 : vector<16x1xf32> to vector<16x16xf32>
    %73 = arith.mulf %68, %72 : vector<16x16xf32>
    %cst_37 = arith.constant dense<0.000000e+00> : vector<16x128xf32>
    %74 = tpu.matmul %73, %61, %cst_37 {dimension_numbers = #tpu.dot_dimension_numbers<[1], [0], [0], [1], [0, 0, 1, 1], [], []>} : vector<16x16xf32>, vector<16x128xf32>, vector<16x128xf32> -> vector<16x128xf32>
    %75 = vector.extract_strided_slice %18 {offsets = [256, 0], sizes = [128, 128], strides = [1, 1]} : vector<512x128xf32> to vector<128x128xf32>
    %cst_38 = arith.constant dense<0.000000e+00> : vector<16x128xf32>
    %76 = tpu.matmul %74, %75, %cst_38 {dimension_numbers = #tpu.dot_dimension_numbers<[1], [0], [0], [1], [0, 0, 1, 1], [], []>} : vector<16x128xf32>, vector<128x128xf32>, vector<16x128xf32> -> vector<16x128xf32>
    %77 = arith.addf %58, %76 : vector<16x128xf32>
    %78 = vector.extract_strided_slice %5 {offsets = [0, 384], sizes = [16, 128], strides = [1, 1]} : vector<16x512xf32> to vector<16x128xf32>
    %79 = vector.extract_strided_slice %11 {offsets = [0, 384], sizes = [16, 128], strides = [1, 1]} : vector<16x512xf32> to vector<16x128xf32>
    %80 = vector.extract_strided_slice %17 {offsets = [0, 384], sizes = [16, 128], strides = [1, 1]} : vector<16x512xf32> to vector<16x128xf32>
    %cst_39 = arith.constant dense<0.000000e+00> : vector<16x16xf32>
    %81 = tpu.matmul %78, %79, %cst_39 {dimension_numbers = #tpu.dot_dimension_numbers<[1], [1], [0], [0], [0, 0, 1, 0], [], []>} : vector<16x128xf32>, vector<16x128xf32>, vector<16x16xf32> -> vector<16x16xf32>
    %82 = arith.addf %81, %19 : vector<16x16xf32>
    %cst_40 = arith.constant dense<0xFF800000> : vector<16xf32>
    %83 = vector.multi_reduction <maximumf>, %82, %cst_40 [1] : vector<16x16xf32> to vector<16xf32>
    %84 = vector.shape_cast %83 : vector<16xf32> to vector<16x1xf32>
    %85 = vector.broadcast %84 : vector<16x1xf32> to vector<16x16xf32>
    %86 = arith.subf %82, %85 : vector<16x16xf32>
    %87 = math.exp %86 : vector<16x16xf32>
    %cst_41 = arith.constant dense<0.000000e+00> : vector<16xf32>
    %88 = vector.multi_reduction <add>, %87, %cst_41 [1] : vector<16x16xf32> to vector<16xf32>
    %89 = vector.shape_cast %88 : vector<16xf32> to vector<16x1xf32>
    %90 = tpu.reciprocal %89 {approx = true} : vector<16x1xf32> -> vector<16x1xf32>
    %91 = vector.broadcast %90 : vector<16x1xf32> to vector<16x16xf32>
    %92 = arith.mulf %87, %91 : vector<16x16xf32>
    %cst_42 = arith.constant dense<0.000000e+00> : vector<16x128xf32>
    %93 = tpu.matmul %92, %80, %cst_42 {dimension_numbers = #tpu.dot_dimension_numbers<[1], [0], [0], [1], [0, 0, 1, 1], [], []>} : vector<16x16xf32>, vector<16x128xf32>, vector<16x128xf32> -> vector<16x128xf32>
    %94 = vector.extract_strided_slice %18 {offsets = [384, 0], sizes = [128, 128], strides = [1, 1]} : vector<512x128xf32> to vector<128x128xf32>
    %cst_43 = arith.constant dense<0.000000e+00> : vector<16x128xf32>
    %95 = tpu.matmul %93, %94, %cst_43 {dimension_numbers = #tpu.dot_dimension_numbers<[1], [0], [0], [1], [0, 0, 1, 1], [], []>} : vector<16x128xf32>, vector<128x128xf32>, vector<16x128xf32> -> vector<16x128xf32>
    %96 = arith.addf %77, %95 : vector<16x128xf32>
    %c0_44 = arith.constant 0 : index
    %c0_45 = arith.constant 0 : index
    %97 = vector.load %arg11[%c0_44, %c0_45] : memref<1x128xf32, #tpu.memory_space<vmem>>, vector<1x128xf32>
    %98 = vector.broadcast %97 : vector<1x128xf32> to vector<16x128xf32>
    %99 = arith.addf %96, %98 : vector<16x128xf32>
    %c0_46 = arith.constant 0 : index
    %c0_47 = arith.constant 0 : index
    %100 = vector.load %arg13[%c0_46, %c0_47] : memref<16x128xf32, #tpu.memory_space<vmem>>, vector<16x128xf32>
    tpu.vector_store %arg13[%c0_46, %c0_47], %99 {strides = array<i32>} : memref<16x128xf32, #tpu.memory_space<vmem>>, vector<16x128xf32>,
    return
  }
  func.func @transform_0(%arg0: i32) -> (i32, i32) {
    %c0_i32 = arith.constant 0 : i32
    %c0_i32_0 = arith.constant 0 : i32
    %c0_i32_1 = arith.constant 0 : i32
    return %c0_i32, %c0_i32_0 : i32, i32
  }
  func.func @transform_1(%arg0: i32) -> (i32, i32) {
    %c0_i32 = arith.constant 0 : i32
    %c0_i32_0 = arith.constant 0 : i32
    %c0_i32_1 = arith.constant 0 : i32
    return %c0_i32, %c0_i32_0 : i32, i32
  }
  func.func @transform_2(%arg0: i32) -> (i32, i32) {
    %c0_i32 = arith.constant 0 : i32
    %c0_i32_0 = arith.constant 0 : i32
    %c0_i32_1 = arith.constant 0 : i32
    return %c0_i32, %c0_i32_0 : i32, i32
  }
  func.func @transform_3(%arg0: i32) -> (i32, i32) {
    %c0_i32 = arith.constant 0 : i32
    %c0_i32_0 = arith.constant 0 : i32
    %c0_i32_1 = arith.constant 0 : i32
    return %c0_i32, %c0_i32_0 : i32, i32
  }
  func.func @transform_4(%arg0: i32) -> (i32, i32) {
    %c0_i32 = arith.constant 0 : i32
    %c0_i32_0 = arith.constant 0 : i32
    %c0_i32_1 = arith.constant 0 : i32
    return %c0_i32, %c0_i32_0 : i32, i32
  }
  func.func @transform_5(%arg0: i32) -> (i32, i32) {
    %c0_i32 = arith.constant 0 : i32
    %c0_i32_0 = arith.constant 0 : i32
    %c0_i32_1 = arith.constant 0 : i32
    return %c0_i32, %c0_i32_0 : i32, i32
  }
  func.func @transform_6(%arg0: i32) -> (i32, i32) {
    %c0_i32 = arith.constant 0 : i32
    %c0_i32_0 = arith.constant 0 : i32
    %c0_i32_1 = arith.constant 0 : i32
    return %c0_i32, %c0_i32_0 : i32, i32
  }
  func.func @transform_7(%arg0: i32) -> (i32, i32) {
    %c0_i32 = arith.constant 0 : i32
    %c0_i32_0 = arith.constant 0 : i32
    %c0_i32_1 = arith.constant 0 : i32
    return %c0_i32, %c0_i32_0 : i32, i32
  }
  func.func @transform_8(%arg0: i32) -> (i32, i32) {
    %c0_i32 = arith.constant 0 : i32
    %c0_i32_0 = arith.constant 0 : i32
    %c0_i32_1 = arith.constant 0 : i32
    return %c0_i32, %c0_i32_0 : i32, i32
  }
  func.func @transform_9(%arg0: i32) -> (i32, i32) {
    %c0_i32 = arith.constant 0 : i32
    %c0_i32_0 = arith.constant 0 : i32
    %c0_i32_1 = arith.constant 0 : i32
    return %c0_i32, %c0_i32_0 : i32, i32
  }
  func.func @transform_10(%arg0: i32) -> (i32, i32) {
    %c0_i32 = arith.constant 0 : i32
    %c0_i32_0 = arith.constant 0 : i32
    %c0_i32_1 = arith.constant 0 : i32
    return %c0_i32, %c0_i32_0 : i32, i32
  }
  func.func @transform_11(%arg0: i32) -> (i32, i32) {
    %c0_i32 = arith.constant 0 : i32
    %c0_i32_0 = arith.constant 0 : i32
    %c0_i32_1 = arith.constant 0 : i32
    return %c0_i32, %c0_i32_0 : i32, i32
  }
  func.func @transform_12(%arg0: i32) -> (i32, i32) {
    %c0_i32 = arith.constant 0 : i32
    %c0_i32_0 = arith.constant 0 : i32
    %c0_i32_1 = arith.constant 0 : i32
    return %c0_i32, %c0_i32_0 : i32, i32
  }
}

</mosaic_0001>

<llo_original>
// kernel: tpu_custom_call.1
$region0: #{tpu_custom_call.1}
  #allocation0 [shape = 'u32[]', space=smem, size = 0x4, offset = 0x4, fixed_abs, tag = 'smem constant byte address 0x4 - core index']
  #allocation1 [shape = 'u32[144,128]{1,0:T(1,128)}', space=vmem, size = 0x12000, scoped, tag = 'internal scratch']
  %s0 = inlined_call_operand.hbm [shape: f32[16,32], index: 0, kind: input, shape index: {}]
  %s1 = inlined_call_operand.hbm [shape: f32[16,32], index: 1, kind: input, shape index: {}]
  %s2 = inlined_call_operand.hbm [shape: f32[16,32], index: 2, kind: input, shape index: {}]
  %s3 = inlined_call_operand.hbm [shape: f32[32,512], index: 3, kind: input, shape index: {}]
  %s4 = inlined_call_operand.hbm [shape: f32[32,512], index: 4, kind: input, shape index: {}]
  %s5 = inlined_call_operand.hbm [shape: f32[32,512], index: 5, kind: input, shape index: {}]
  %s6 = inlined_call_operand.vmem [shape: f32[1,512], index: 6, kind: input, shape index: {}]
  %s7 = inlined_call_operand.vmem [shape: f32[1,512], index: 7, kind: input, shape index: {}]
  %s8 = inlined_call_operand.vmem [shape: f32[1,512], index: 8, kind: input, shape index: {}]
  %s9 = inlined_call_operand.hbm [shape: f32[512,128], index: 9, kind: input, shape index: {}]
  %s10 = inlined_call_operand.vmem [shape: f32[1,128], index: 10, kind: input, shape index: {}]
  %s11 = inlined_call_operand.vmem [shape: f32[16,16], index: 11, kind: input, shape index: {}]
  %s12 = inlined_call_operand.hbm [shape: f32[16,128], index: 12, kind: output, shape index: {}]
  %s13 = sld [smem:[#allocation0]]
  $region86: #{tpu_custom_call.1} parent=0
    _
  %s15 = ssub.s32 1, %s13
  %s16 = scalar_select 0, %s15, %s13
  $region1: #{tpu_custom_call.1} parent=0
    #allocation2 [shape = 'u8[8192]{0}', space=vmem, size = 0x2000, scoped, tag = 'input window, operand 0, single buffered']
    #allocation3 [shape = 's32[1]{0}', space=sflag, size = 0x4, scoped, tag = 'scoped memory for tpu_custom_call.1']
    #allocation4 [shape = 's32[1]{0}', space=sflag, size = 0x4, scoped, tag = 'scoped memory for tpu_custom_call.1']
    #allocation5 [shape = 'u8[8192]{0}', space=vmem, size = 0x2000, scoped, tag = 'input window, operand 1, single buffered']
    #allocation6 [shape = 's32[1]{0}', space=sflag, size = 0x4, scoped, tag = 'scoped memory for tpu_custom_call.1']
    #allocation7 [shape = 'u8[8192]{0}', space=vmem, size = 0x2000, scoped, tag = 'input window, operand 2, single buffered']
    #allocation8 [shape = 'u8[65536]{0}', space=vmem, size = 0x10000, scoped, tag = 'input window, operand 3, single buffered']
    #allocation9 [shape = 's32[1]{0}', space=sflag, size = 0x4, scoped, tag = 'scoped memory for tpu_custom_call.1']
    #allocation10 [shape = 'u8[65536]{0}', space=vmem, size = 0x10000, scoped, tag = 'input window, operand 4, single buffered']
    #allocation11 [shape = 'u8[65536]{0}', space=vmem, size = 0x10000, scoped, tag = 'input window, operand 5, single buffered']
    #allocation12 [shape = 's32[1]{0}', space=sflag, size = 0x4, scoped, tag = 'scoped memory for tpu_custom_call.1']
    #allocation13 [shape = 'u8[262144]{0}', space=vmem, size = 0x40000, scoped, tag = 'input window, operand 9, single buffered']
    #allocation14 [shape = 'u8[8192]{0}', space=vmem, size = 0x2000, scoped, tag = 'output window, operand 0, single buffered']
    %17 = vsyncpa [#allocation3], 0
    %18 = vsyncpa [#allocation6], 0
    %19 = vsyncpa [#allocation9], 0
    %20 = vsyncpa [#allocation12], 0
    %21 = vsyncpa [#allocation4], 0
    // Predicated region
    $region2: #{tpu_custom_call.1} parent=1 // pred_check
      _
    $region3: #{tpu_custom_call.1} parent=1 // pred_check_branch
      %23 = sbr.rel (0) target = $region5
    $region4: #{tpu_custom_call.1} parent=1 // pred_region
      %s25 = ssub.s32 256, 256
      %26 = vsyncadd [#allocation3], %s25
      %s27 = sshll.u32 [#allocation2], 4
      %s28 = int_to_ptr.vmem [resolvable:$true] %s27
      %33 = dma.hbm_to_vmem [thread:$0]  %s0, 256, %s28, [#allocation3], 128, 128, 8
    $region5: #{tpu_custom_call.1} parent=1 // pred_fallthru
      _
    // Predicated region
    $region6: #{tpu_custom_call.1} parent=1 // pred_check
      _
    $region7: #{tpu_custom_call.1} parent=1 // pred_check_branch
      %35 = sbr.rel (0) target = $region9
    $region8: #{tpu_custom_call.1} parent=1 // pred_region
      %s37 = ssub.s32 256, 256
      %38 = vsyncadd [#allocation6], %s37
      %s39 = sshll.u32 [#allocation5], 4
      %s40 = int_to_ptr.vmem [resolvable:$true] %s39
      %45 = dma.hbm_to_vmem [thread:$0]  %s1, 256, %s40, [#allocation6], 128, 128, 8
    $region9: #{tpu_custom_call.1} parent=1 // pred_fallthru
      _
    // Predicated region
    $region10: #{tpu_custom_call.1} parent=1 // pred_check
      _
    $region11: #{tpu_custom_call.1} parent=1 // pred_check_branch
      %47 = sbr.rel (0) target = $region13
    $region12: #{tpu_custom_call.1} parent=1 // pred_region
      %s49 = ssub.s32 256, 256
      %50 = vsyncadd [#allocation6], %s49
      %s51 = sshll.u32 [#allocation7], 4
      %s52 = int_to_ptr.vmem [resolvable:$true] %s51
      %57 = dma.hbm_to_vmem [thread:$0]  %s2, 256, %s52, [#allocation6], 128, 128, 8
    $region13: #{tpu_custom_call.1} parent=1 // pred_fallthru
      _
    // Predicated region
    $region14: #{tpu_custom_call.1} parent=1 // pred_check
      _
    $region15: #{tpu_custom_call.1} parent=1 // pred_check_branch
      %59 = sbr.rel (0) target = $region17
    $region16: #{tpu_custom_call.1} parent=1 // pred_region
      %s61 = ssub.s32 2048, 2048
      %62 = vsyncadd [#allocation9], %s61
      %s63 = sshll.u32 [#allocation8], 4
      %s64 = int_to_ptr.vmem [resolvable:$true] %s63
      %69 = dma.hbm_to_vmem [thread:$0]  %s3, 2048, %s64, [#allocation9], 512, 512, 32
    $region17: #{tpu_custom_call.1} parent=1 // pred_fallthru
      _
    // Predicated region
    $region18: #{tpu_custom_call.1} parent=1 // pred_check
      _
    $region19: #{tpu_custom_call.1} parent=1 // pred_check_branch
      %71 = sbr.rel (0) target = $region21
    $region20: #{tpu_custom_call.1} parent=1 // pred_region
      %s73 = ssub.s32 2048, 2048
      %74 = vsyncadd [#allocation9], %s73
      %s75 = sshll.u32 [#allocation10], 4
      %s76 = int_to_ptr.vmem [resolvable:$true] %s75
      %81 = dma.hbm_to_vmem [thread:$0]  %s4, 2048, %s76, [#allocation9], 512, 512, 32
    $region21: #{tpu_custom_call.1} parent=1 // pred_fallthru
      _
    // Predicated region
    $region22: #{tpu_custom_call.1} parent=1 // pred_check
      _
    $region23: #{tpu_custom_call.1} parent=1 // pred_check_branch
      %83 = sbr.rel (0) target = $region25
    $region24: #{tpu_custom_call.1} parent=1 // pred_region
      %s85 = ssub.s32 2048, 2048
      %86 = vsyncadd [#allocation12], %s85
      %s87 = sshll.u32 [#allocation11], 4
      %s88 = int_to_ptr.vmem [resolvable:$true] %s87
      %93 = dma.hbm_to_vmem [thread:$0]  %s5, 2048, %s88, [#allocation12], 512, 512, 32
    $region25: #{tpu_custom_call.1} parent=1 // pred_fallthru
      _
    // Predicated region
    $region26: #{tpu_custom_call.1} parent=1 // pred_check
      _
    $region27: #{tpu_custom_call.1} parent=1 // pred_check_branch
      %95 = sbr.rel (0) target = $region29
    $region28: #{tpu_custom_call.1} parent=1 // pred_region
      _
    $region29: #{tpu_custom_call.1} parent=1 // pred_fallthru
      _
    // Predicated region
    $region30: #{tpu_custom_call.1} parent=1 // pred_check
      _
    $region31: #{tpu_custom_call.1} parent=1 // pred_check_branch
      %97 = sbr.rel (0) target = $region33
    $region32: #{tpu_custom_call.1} parent=1 // pred_region
      _
    $region33: #{tpu_custom_call.1} parent=1 // pred_fallthru
      _
    // Predicated region
    $region34: #{tpu_custom_call.1} parent=1 // pred_check
      _
    $region35: #{tpu_custom_call.1} parent=1 // pred_check_branch
      %99 = sbr.rel (0) target = $region37
    $region36: #{tpu_custom_call.1} parent=1 // pred_region
      _
    $region37: #{tpu_custom_call.1} parent=1 // pred_fallthru
      _
    // Predicated region
    $region38: #{tpu_custom_call.1} parent=1 // pred_check
      _
    $region39: #{tpu_custom_call.1} parent=1 // pred_check_branch
      %101 = sbr.rel (0) target = $region41
    $region40: #{tpu_custom_call.1} parent=1 // pred_region
      %s103 = ssub.s32 8192, 8192
      %104 = vsyncadd [#allocation12], %s103
      %s105 = sshll.u32 [#allocation13], 4
      %s106 = int_to_ptr.vmem [resolvable:$true] %s105
      %111 = dma.hbm_to_vmem [thread:$0]  %s9, 8192, %s106, [#allocation12], 128, 128, 8
    $region41: #{tpu_custom_call.1} parent=1 // pred_fallthru
      _
    // Predicated region
    $region42: #{tpu_custom_call.1} parent=1 // pred_check
      _
    $region43: #{tpu_custom_call.1} parent=1 // pred_check_branch
      %113 = sbr.rel (0) target = $region45
    $region44: #{tpu_custom_call.1} parent=1 // pred_region
      _
    $region45: #{tpu_custom_call.1} parent=1 // pred_fallthru
      _
    // Predicated region
    $region46: #{tpu_custom_call.1} parent=1 // pred_check
      _
    $region47: #{tpu_custom_call.1} parent=1 // pred_check_branch
      %115 = sbr.rel (0) target = $region49
    $region48: #{tpu_custom_call.1} parent=1 // pred_region
      _
    $region49: #{tpu_custom_call.1} parent=1 // pred_fallthru
      _
    // Predicated region
    $region50: #{tpu_custom_call.1} parent=1 // pred_check
      _
    $region51: #{tpu_custom_call.1} parent=1 // pred_check_branch
      %117 = sbr.rel (0) target = $region53
    $region52: #{tpu_custom_call.1} parent=1 // pred_region
      %118 = dma.done [#allocation3], 256
    $region53: #{tpu_custom_call.1} parent=1 // pred_fallthru
      _
    // Predicated region
    $region54: #{tpu_custom_call.1} parent=1 // pred_check
      _
    $region55: #{tpu_custom_call.1} parent=1 // pred_check_branch
      %120 = sbr.rel (0) target = $region57
    $region56: #{tpu_custom_call.1} parent=1 // pred_region
      %121 = dma.done [#allocation6], 256
    $region57: #{tpu_custom_call.1} parent=1 // pred_fallthru
      _
    // Predicated region
    $region58: #{tpu_custom_call.1} parent=1 // pred_check
      _
    $region59: #{tpu_custom_call.1} parent=1 // pred_check_branch
      %123 = sbr.rel (0) target = $region61
    $region60: #{tpu_custom_call.1} parent=1 // pred_region
      %124 = dma.done [#allocation6], 256
    $region61: #{tpu_custom_call.1} parent=1 // pred_fallthru
      _
    // Predicated region
    $region62: #{tpu_custom_call.1} parent=1 // pred_check
      _
    $region63: #{tpu_custom_call.1} parent=1 // pred_check_branch
      %126 = sbr.rel (0) target = $region65
    $region64: #{tpu_custom_call.1} parent=1 // pred_region
      %127 = dma.done [#allocation9], 2048
    $region65: #{tpu_custom_call.1} parent=1 // pred_fallthru
      _
    // Predicated region
    $region66: #{tpu_custom_call.1} parent=1 // pred_check
      _
    $region67: #{tpu_custom_call.1} parent=1 // pred_check_branch
      %129 = sbr.rel (0) target = $region69
    $region68: #{tpu_custom_call.1} parent=1 // pred_region
      %130 = dma.done [#allocation9], 2048
    $region69: #{tpu_custom_call.1} parent=1 // pred_fallthru
      _
    // Predicated region
    $region70: #{tpu_custom_call.1} parent=1 // pred_check
      _
    $region71: #{tpu_custom_call.1} parent=1 // pred_check_branch
      %132 = sbr.rel (0) target = $region73
    $region72: #{tpu_custom_call.1} parent=1 // pred_region
      %133 = dma.done [#allocation12], 2048
    $region73: #{tpu_custom_call.1} parent=1 // pred_fallthru
      _
    // Predicated region
    $region74: #{tpu_custom_call.1} parent=1 // pred_check
      _
    $region75: #{tpu_custom_call.1} parent=1 // pred_check_branch
      %135 = sbr.rel (0) target = $region77
    $region76: #{tpu_custom_call.1} parent=1 // pred_region
      %136 = dma.done [#allocation12], 8192
    $region77: #{tpu_custom_call.1} parent=1 // pred_fallthru
      _
    %v137 = vld [vmem:[#allocation2] sm:$0xff]
    %v138 = vld [vmem:[#allocation2 + $0x8] sm:$0xff]
    %v139 = vld [vmem:[#allocation8] sm:$0xff]
    %v140 = vld [vmem:[#allocation8 + $0x8] sm:$0xff]
    %v141 = vld [vmem:[#allocation8 + $0x10] sm:$0xff]
    %v142 = vld [vmem:[#allocation8 + $0x18] sm:$0xff]
    %v143 = vld [vmem:[#allocation8 + $0x20] sm:$0xff]
    %v144 = vld [vmem:[#allocation8 + $0x28] sm:$0xff]
    %v145 = vld [vmem:[#allocation8 + $0x30] sm:$0xff]
    %v146 = vld [vmem:[#allocation8 + $0x38] sm:$0xff]
    %v147 = vld [vmem:[#allocation8 + $0x40] sm:$0xff]
    %v148 = vld [vmem:[#allocation8 + $0x48] sm:$0xff]
    %v149 = vld [vmem:[#allocation8 + $0x50] sm:$0xff]
    %v150 = vld [vmem:[#allocation8 + $0x58] sm:$0xff]
    %v151 = vld [vmem:[#allocation8 + $0x60] sm:$0xff]
    %v152 = vld [vmem:[#allocation8 + $0x68] sm:$0xff]
    %v153 = vld [vmem:[#allocation8 + $0x70] sm:$0xff]
    %v154 = vld [vmem:[#allocation8 + $0x78] sm:$0xff]
    %v155 = vld [vmem:[%s6] sm:$0xf]
    %v157 = vlaneseq
    %v158 = vshrl.u32 %v157, 7
    %v159 = vsub.s32 0, %v158
    %v160 = vrot.slane %v155, %v159
    %v161 = vlaneseq
    %v162 = vshrl.u32 %v161, 7
    %v163 = vsub.s32 1, %v162
    %v164 = vrot.slane %v155, %v163
    %v165 = vlaneseq
    %v166 = vshrl.u32 %v165, 7
    %v167 = vsub.s32 2, %v166
    %v168 = vrot.slane %v155, %v167
    %v169 = vlaneseq
    %v170 = vshrl.u32 %v169, 7
    %v171 = vsub.s32 3, %v170
    %v172 = vrot.slane %v155, %v171
    %vm177 = vcmask 261120
    %v179 = vsel %vm177, %v137, 0
    %v182 = vsel %vm177, %v138, 0
    %184 = vmatprep.subr.mxu0 %v140
    %185 = vmatpush1.msra.mxu0 %v139
    %186 = vmatprep.subr.mxu0 %v144
    %187 = vmatpush1.msra.mxu0 %v143
    %188 = vmatprep.subr.mxu0 %v148
    %189 = vmatpush1.msra.mxu0 %v147
    %190 = vmatprep.subr.mxu0 %v152
    %191 = vmatpush1.msra.mxu0 %v151
    %192 = vmatprep.subr.mxu0 0.0
    %193 = vmatpush1.msra.mxu0 0.0
    %194 = vmatprep.subr.mxu0 0.0
    %195 = vmatpush1.msra.mxu0 0.0
    %196 = vmatprep.subr.mxu0 0.0
    %197 = vmatpush1.msra.mxu0 0.0
    %198 = vmatprep.subr.mxu0 0.0
    %199 = vmatpush1.msra.mxu0 0.0
    %200 = vmatprep.subr.mxu0 0.0
    %201 = vmatpush1.msra.mxu0 0.0
    %202 = vmatprep.subr.mxu0 0.0
    %203 = vmatpush1.msra.mxu0 0.0
    %204 = vmatprep.subr.mxu0 0.0
    %205 = vmatpush1.msra.mxu0 0.0
    %206 = vmatprep.subr.mxu0 0.0
    %207 = vmatpush1.msra.mxu0 0.0
    %208 = vmatprep.subr.mxu0 0.0
    %209 = vmatpush1.msra.mxu0 0.0
    %210 = vmatprep.subr.mxu0 0.0
    %211 = vmatpush1.msra.mxu0 0.0
    %212 = vmatprep.subr.mxu0 0.0
    %213 = vmatpush1.msra.mxu0 0.0
    %214 = vmatprep.subr.mxu0 0.0
    %215 = vmatpush1.msra.mxu0 0.0
    %216 = vmatprep.subr.mxu0 0.0
    %217 = vmatpush1.msra.mxu0 0.0
    %218 = vmatprep.subr.mxu0 0.0
    %219 = vmatpush1.msra.mxu0 0.0
    %220 = vmatprep.subr.mxu0 0.0
    %221 = vmatpush1.msra.mxu0 0.0
    %222 = vmatprep.subr.mxu0 0.0
    %223 = vmatpush1.msra.mxu0 0.0
    %224 = vmatprep.subr.mxu0 0.0
    %225 = vmatpush1.msra.mxu0 0.0
    %226 = vmatprep.subr.mxu0 0.0
    %227 = vmatpush1.msra.mxu0 0.0
    %228 = vmatprep.subr.mxu0 0.0
    %229 = vmatpush1.msra.mxu0 0.0
    %230 = vmatprep.subr.mxu0 0.0
    %231 = vmatpush1.msra.mxu0 0.0
    %232 = vmatprep.subr.mxu0 0.0
    %233 = vmatpush1.msra.mxu0 0.0
    %234 = vmatprep.subr.mxu0 0.0
    %235 = vmatpush1.msra.mxu0 0.0
    %236 = vmatprep.subr.mxu0 0.0
    %237 = vmatpush1.msra.mxu0 0.0
    %238 = vmatprep.subr.mxu0 0.0
    %239 = vmatpush1.msra.mxu0 0.0
    %240 = vmatprep.subr.mxu0 0.0
    %241 = vmatpush1.msra.mxu0 0.0
    %242 = vmatprep.subr.mxu0 0.0
    %243 = vmatpush1.msra.mxu0 0.0
    %244 = vmatprep.subr.mxu0 0.0
    %245 = vmatpush1.msra.mxu0 0.0
    %246 = vmatprep.subr.mxu0 0.0
    %247 = vmatpush1.msra.mxu0 0.0
    %248 = vmatprep.mubr.f32.mxu0 0.0
    %249 = vmatmul.mubr.f32.gmra.mrb[0].mxu0 %v179
    %v250 = vpop.f32.mrb[0].mxu0
    %v251 = vadd.f32 %v160, %v250
    %v252 = vpop.f32.mrb[0].mxu0
    %v253 = vadd.f32 %v164, %v252
    %254 = vmatprep.mubr.f32.mxu0 0.0
    %255 = vmatmul.mubr.f32.gmra.mrb[0].mxu0 %v182
    %v256 = vpop.f32.mrb[0].mxu0
    %v257 = vadd.f32 %v160, %v256
    %v258 = vpop.f32.mrb[0].mxu0
    %v259 = vadd.f32 %v164, %v258
    %260 = vdwg.mxu0
    %261 = vmatprep.subr.mxu0 %v142
    %262 = vmatpush1.msra.mxu0 %v141
    %263 = vmatprep.subr.mxu0 %v146
    %264 = vmatpush1.msra.mxu0 %v145
    %265 = vmatprep.subr.mxu0 %v150
    %266 = vmatpush1.msra.mxu0 %v149
    %267 = vmatprep.subr.mxu0 %v154
    %268 = vmatpush1.msra.mxu0 %v153
    %269 = vmatprep.subr.mxu0 0.0
    %270 = vmatpush1.msra.mxu0 0.0
    %271 = vmatprep.subr.mxu0 0.0
    %272 = vmatpush1.msra.mxu0 0.0
    %273 = vmatprep.subr.mxu0 0.0
    %274 = vmatpush1.msra.mxu0 0.0
    %275 = vmatprep.subr.mxu0 0.0
    %276 = vmatpush1.msra.mxu0 0.0
    %277 = vmatprep.subr.mxu0 0.0
    %278 = vmatpush1.msra.mxu0 0.0
    %279 = vmatprep.subr.mxu0 0.0
    %280 = vmatpush1.msra.mxu0 0.0
    %281 = vmatprep.subr.mxu0 0.0
    %282 = vmatpush1.msra.mxu0 0.0
    %283 = vmatprep.subr.mxu0 0.0
    %284 = vmatpush1.msra.mxu0 0.0
    %285 = vmatprep.subr.mxu0 0.0
    %286 = vmatpush1.msra.mxu0 0.0
    %287 = vmatprep.subr.mxu0 0.0
    %288 = vmatpush1.msra.mxu0 0.0
    %289 = vmatprep.subr.mxu0 0.0
    %290 = vmatpush1.msra.mxu0 0.0
    %291 = vmatprep.subr.mxu0 0.0
    %292 = vmatpush1.msra.mxu0 0.0
    %293 = vmatprep.subr.mxu0 0.0
    %294 = vmatpush1.msra.mxu0 0.0
    %295 = vmatprep.subr.mxu0 0.0
    %296 = vmatpush1.msra.mxu0 0.0
    %297 = vmatprep.subr.mxu0 0.0
    %298 = vmatpush1.msra.mxu0 0.0
    %299 = vmatprep.subr.mxu0 0.0
    %300 = vmatpush1.msra.mxu0 0.0
    %301 = vmatprep.subr.mxu0 0.0
    %302 = vmatpush1.msra.mxu0 0.0
    %303 = vmatprep.subr.mxu0 0.0
    %304 = vmatpush1.msra.mxu0 0.0
    %305 = vmatprep.subr.mxu0 0.0
    %306 = vmatpush1.msra.mxu0 0.0
    %307 = vmatprep.subr.mxu0 0.0
    %308 = vmatpush1.msra.mxu0 0.0
    %309 = vmatprep.subr.mxu0 0.0
    %310 = vmatpush1.msra.mxu0 0.0
    %311 = vmatprep.subr.mxu0 0.0
    %312 = vmatpush1.msra.mxu0 0.0
    %313 = vmatprep.subr.mxu0 0.0
    %314 = vmatpush1.msra.mxu0 0.0
    %315 = vmatprep.subr.mxu0 0.0
    %316 = vmatpush1.msra.mxu0 0.0
    %317 = vmatprep.subr.mxu0 0.0
    %318 = vmatpush1.msra.mxu0 0.0
    %319 = vmatprep.subr.mxu0 0.0
    %320 = vmatpush1.msra.mxu0 0.0
    %321 = vmatprep.subr.mxu0 0.0
    %322 = vmatpush1.msra.mxu0 0.0
    %323 = vmatprep.subr.mxu0 0.0
    %324 = vmatpush1.msra.mxu0 0.0
    %325 = vmatprep.mubr.f32.mxu0 0.0
    %326 = vmatmul.mubr.f32.gmra.mrb[0].mxu0 %v179
    %v327 = vpop.f32.mrb[0].mxu0
    %v328 = vadd.f32 %v168, %v327
    %v329 = vpop.f32.mrb[0].mxu0
    %v330 = vadd.f32 %v172, %v329
    %331 = vmatprep.mubr.f32.mxu0 0.0
    %332 = vmatmul.mubr.f32.gmra.mrb[0].mxu0 %v182
    %v333 = vpop.f32.mrb[0].mxu0
    %v334 = vadd.f32 %v168, %v333
    %v335 = vpop.f32.mrb[0].mxu0
    %v336 = vadd.f32 %v172, %v335
    %337 = vdwg.mxu0
    %v338 = vld [vmem:[#allocation5] sm:$0xff]
    %v339 = vld [vmem:[#allocation5 + $0x8] sm:$0xff]
    %v340 = vld [vmem:[#allocation10] sm:$0xff]
    %v341 = vld [vmem:[#allocation10 + $0x8] sm:$0xff]
    %v342 = vld [vmem:[#allocation10 + $0x10] sm:$0xff]
    %v343 = vld [vmem:[#allocation10 + $0x18] sm:$0xff]
    %v344 = vld [vmem:[#allocation10 + $0x20] sm:$0xff]
    %v345 = vld [vmem:[#allocation10 + $0x28] sm:$0xff]
    %v346 = vld [vmem:[#allocation10 + $0x30] sm:$0xff]
    %v347 = vld [vmem:[#allocation10 + $0x38] sm:$0xff]
    %v348 = vld [vmem:[#allocation10 + $0x40] sm:$0xff]
    %v349 = vld [vmem:[#allocation10 + $0x48] sm:$0xff]
    %v350 = vld [vmem:[#allocation10 + $0x50] sm:$0xff]
    %v351 = vld [vmem:[#allocation10 + $0x58] sm:$0xff]
    %v352 = vld [vmem:[#allocation10 + $0x60] sm:$0xff]
    %v353 = vld [vmem:[#allocation10 + $0x68] sm:$0xff]
    %v354 = vld [vmem:[#allocation10 + $0x70] sm:$0xff]
    %v355 = vld [vmem:[#allocation10 + $0x78] sm:$0xff]
    %v356 = vld [vmem:[%s7] sm:$0xf]
    %v358 = vlaneseq
    %v359 = vshrl.u32 %v358, 7
    %v360 = vsub.s32 0, %v359
    %v361 = vrot.slane %v356, %v360
    %v362 = vlaneseq
    %v363 = vshrl.u32 %v362, 7
    %v364 = vsub.s32 1, %v363
    %v365 = vrot.slane %v356, %v364
    %v366 = vlaneseq
    %v367 = vshrl.u32 %v366, 7
    %v368 = vsub.s32 2, %v367
    %v369 = vrot.slane %v356, %v368
    %v370 = vlaneseq
    %v371 = vshrl.u32 %v370, 7
    %v372 = vsub.s32 3, %v371
    %v373 = vrot.slane %v356, %v372
    %v379 = vsel %vm177, %v338, 0
    %v382 = vsel %vm177, %v339, 0
    %384 = vmatprep.subr.mxu0 %v341
    %385 = vmatpush1.msra.mxu0 %v340
    %386 = vmatprep.subr.mxu0 %v345
    %387 = vmatpush1.msra.mxu0 %v344
    %388 = vmatprep.subr.mxu0 %v349
    %389 = vmatpush1.msra.mxu0 %v348
    %390 = vmatprep.subr.mxu0 %v353
    %391 = vmatpush1.msra.mxu0 %v352
    %392 = vmatprep.subr.mxu0 0.0
    %393 = vmatpush1.msra.mxu0 0.0
    %394 = vmatprep.subr.mxu0 0.0
    %395 = vmatpush1.msra.mxu0 0.0
    %396 = vmatprep.subr.mxu0 0.0
    %397 = vmatpush1.msra.mxu0 0.0
    %398 = vmatprep.subr.mxu0 0.0
    %399 = vmatpush1.msra.mxu0 0.0
    %400 = vmatprep.subr.mxu0 0.0
    %401 = vmatpush1.msra.mxu0 0.0
    %402 = vmatprep.subr.mxu0 0.0
    %403 = vmatpush1.msra.mxu0 0.0
    %404 = vmatprep.subr.mxu0 0.0
    %405 = vmatpush1.msra.mxu0 0.0
    %406 = vmatprep.subr.mxu0 0.0
    %407 = vmatpush1.msra.mxu0 0.0
    %408 = vmatprep.subr.mxu0 0.0
    %409 = vmatpush1.msra.mxu0 0.0
    %410 = vmatprep.subr.mxu0 0.0
    %411 = vmatpush1.msra.mxu0 0.0
    %412 = vmatprep.subr.mxu0 0.0
    %413 = vmatpush1.msra.mxu0 0.0
    %414 = vmatprep.subr.mxu0 0.0
    %415 = vmatpush1.msra.mxu0 0.0
    %416 = vmatprep.subr.mxu0 0.0
    %417 = vmatpush1.msra.mxu0 0.0
    %418 = vmatprep.subr.mxu0 0.0
    %419 = vmatpush1.msra.mxu0 0.0
    %420 = vmatprep.subr.mxu0 0.0
    %421 = vmatpush1.msra.mxu0 0.0
    %422 = vmatprep.subr.mxu0 0.0
    %423 = vmatpush1.msra.mxu0 0.0
    %424 = vmatprep.subr.mxu0 0.0
    %425 = vmatpush1.msra.mxu0 0.0
    %426 = vmatprep.subr.mxu0 0.0
    %427 = vmatpush1.msra.mxu0 0.0
    %428 = vmatprep.subr.mxu0 0.0
    %429 = vmatpush1.msra.mxu0 0.0
    %430 = vmatprep.subr.mxu0 0.0
    %431 = vmatpush1.msra.mxu0 0.0
    %432 = vmatprep.subr.mxu0 0.0
    %433 = vmatpush1.msra.mxu0 0.0
    %434 = vmatprep.subr.mxu0 0.0
    %435 = vmatpush1.msra.mxu0 0.0
    %436 = vmatprep.subr.mxu0 0.0
    %437 = vmatpush1.msra.mxu0 0.0
    %438 = vmatprep.subr.mxu0 0.0
    %439 = vmatpush1.msra.mxu0 0.0
    %440 = vmatprep.subr.mxu0 0.0
    %441 = vmatpush1.msra.mxu0 0.0
    %442 = vmatprep.subr.mxu0 0.0
    %443 = vmatpush1.msra.mxu0 0.0
    %444 = vmatprep.subr.mxu0 0.0
    %445 = vmatpush1.msra.mxu0 0.0
    %446 = vmatprep.subr.mxu0 0.0
    %447 = vmatpush1.msra.mxu0 0.0
    %448 = vmatprep.mubr.f32.mxu0 0.0
    %449 = vmatmul.mubr.f32.gmra.mrb[0].mxu0 %v379
    %v450 = vpop.f32.mrb[0].mxu0
    %v451 = vadd.f32 %v361, %v450
    %v452 = vpop.f32.mrb[0].mxu0
    %v453 = vadd.f32 %v365, %v452
    %454 = vmatprep.mubr.f32.mxu0 0.0
    %455 = vmatmul.mubr.f32.gmra.mrb[0].mxu0 %v382
    %v456 = vpop.f32.mrb[0].mxu0
    %v457 = vadd.f32 %v361, %v456
    %v458 = vpop.f32.mrb[0].mxu0
    %v459 = vadd.f32 %v365, %v458
    %460 = vdwg.mxu0
    %461 = vmatprep.subr.mxu0 %v343
    %462 = vmatpush1.msra.mxu0 %v342
    %463 = vmatprep.subr.mxu0 %v347
    %464 = vmatpush1.msra.mxu0 %v346
    %465 = vmatprep.subr.mxu0 %v351
    %466 = vmatpush1.msra.mxu0 %v350
    %467 = vmatprep.subr.mxu0 %v355
    %468 = vmatpush1.msra.mxu0 %v354
    %469 = vmatprep.subr.mxu0 0.0
    %470 = vmatpush1.msra.mxu0 0.0
    %471 = vmatprep.subr.mxu0 0.0
    %472 = vmatpush1.msra.mxu0 0.0
    %473 = vmatprep.subr.mxu0 0.0
    %474 = vmatpush1.msra.mxu0 0.0
    %475 = vmatprep.subr.mxu0 0.0
    %476 = vmatpush1.msra.mxu0 0.0
    %477 = vmatprep.subr.mxu0 0.0
    %478 = vmatpush1.msra.mxu0 0.0
    %479 = vmatprep.subr.mxu0 0.0
    %480 = vmatpush1.msra.mxu0 0.0
    %481 = vmatprep.subr.mxu0 0.0
    %482 = vmatpush1.msra.mxu0 0.0
    %483 = vmatprep.subr.mxu0 0.0
    %484 = vmatpush1.msra.mxu0 0.0
    %485 = vmatprep.subr.mxu0 0.0
    %486 = vmatpush1.msra.mxu0 0.0
    %487 = vmatprep.subr.mxu0 0.0
    %488 = vmatpush1.msra.mxu0 0.0
    %489 = vmatprep.subr.mxu0 0.0
    %490 = vmatpush1.msra.mxu0 0.0
    %491 = vmatprep.subr.mxu0 0.0
    %492 = vmatpush1.msra.mxu0 0.0
    %493 = vmatprep.subr.mxu0 0.0
    %494 = vmatpush1.msra.mxu0 0.0
    %495 = vmatprep.subr.mxu0 0.0
    %496 = vmatpush1.msra.mxu0 0.0
    %497 = vmatprep.subr.mxu0 0.0
    %498 = vmatpush1.msra.mxu0 0.0
    %499 = vmatprep.subr.mxu0 0.0
    %500 = vmatpush1.msra.mxu0 0.0
    %501 = vmatprep.subr.mxu0 0.0
    %502 = vmatpush1.msra.mxu0 0.0
    %503 = vmatprep.subr.mxu0 0.0
    %504 = vmatpush1.msra.mxu0 0.0
    %505 = vmatprep.subr.mxu0 0.0
    %506 = vmatpush1.msra.mxu0 0.0
    %507 = vmatprep.subr.mxu0 0.0
    %508 = vmatpush1.msra.mxu0 0.0
    %509 = vmatprep.subr.mxu0 0.0
    %510 = vmatpush1.msra.mxu0 0.0
    %511 = vmatprep.subr.mxu0 0.0
    %512 = vmatpush1.msra.mxu0 0.0
    %513 = vmatprep.subr.mxu0 0.0
    %514 = vmatpush1.msra.mxu0 0.0
    %515 = vmatprep.subr.mxu0 0.0
    %516 = vmatpush1.msra.mxu0 0.0
    %517 = vmatprep.subr.mxu0 0.0
    %518 = vmatpush1.msra.mxu0 0.0
    %519 = vmatprep.subr.mxu0 0.0
    %520 = vmatpush1.msra.mxu0 0.0
    %521 = vmatprep.subr.mxu0 0.0
    %522 = vmatpush1.msra.mxu0 0.0
    %523 = vmatprep.subr.mxu0 0.0
    %524 = vmatpush1.msra.mxu0 0.0
    %525 = vmatprep.mubr.f32.mxu0 0.0
    %526 = vmatmul.mubr.f32.gmra.mrb[0].mxu0 %v379
    %v527 = vpop.f32.mrb[0].mxu0
    %v528 = vadd.f32 %v369, %v527
    %v529 = vpop.f32.mrb[0].mxu0
    %v530 = vadd.f32 %v373, %v529
    %531 = vmatprep.mubr.f32.mxu0 0.0
    %532 = vmatmul.mubr.f32.gmra.mrb[0].mxu0 %v382
    %v533 = vpop.f32.mrb[0].mxu0
    %v534 = vadd.f32 %v369, %v533
    %v535 = vpop.f32.mrb[0].mxu0
    %v536 = vadd.f32 %v373, %v535
    %537 = vdwg.mxu0
    %v538 = vld [vmem:[#allocation7] sm:$0xff]
    %v539 = vld [vmem:[#allocation7 + $0x8] sm:$0xff]
    %v540 = vld [vmem:[#allocation11] sm:$0xff]
    %v541 = vld [vmem:[#allocation11 + $0x8] sm:$0xff]
    %v542 = vld [vmem:[#allocation11 + $0x10] sm:$0xff]
    %v543 = vld [vmem:[#allocation11 + $0x18] sm:$0xff]
    %v544 = vld [vmem:[#allocation11 + $0x20] sm:$0xff]
    %v545 = vld [vmem:[#allocation11 + $0x28] sm:$0xff]
    %v546 = vld [vmem:[#allocation11 + $0x30] sm:$0xff]
    %v547 = vld [vmem:[#allocation11 + $0x38] sm:$0xff]
    %v548 = vld [vmem:[#allocation11 + $0x40] sm:$0xff]
    %v549 = vld [vmem:[#allocation11 + $0x48] sm:$0xff]
    %v550 = vld [vmem:[#allocation11 + $0x50] sm:$0xff]
    %v551 = vld [vmem:[#allocation11 + $0x58] sm:$0xff]
    %v552 = vld [vmem:[#allocation11 + $0x60] sm:$0xff]
    %v553 = vld [vmem:[#allocation11 + $0x68] sm:$0xff]
    %v554 = vld [vmem:[#allocation11 + $0x70] sm:$0xff]
    %v555 = vld [vmem:[#allocation11 + $0x78] sm:$0xff]
    %v556 = vld [vmem:[%s8] sm:$0xf]
    %v558 = vlaneseq
    %v559 = vshrl.u32 %v558, 7
    %v560 = vsub.s32 0, %v559
    %v561 = vrot.slane %v556, %v560
    %v562 = vlaneseq
    %v563 = vshrl.u32 %v562, 7
    %v564 = vsub.s32 1, %v563
    %v565 = vrot.slane %v556, %v564
    %v566 = vlaneseq
    %v567 = vshrl.u32 %v566, 7
    %v568 = vsub.s32 2, %v567
    %v569 = vrot.slane %v556, %v568
    %v570 = vlaneseq
    %v571 = vshrl.u32 %v570, 7
    %v572 = vsub.s32 3, %v571
    %v573 = vrot.slane %v556, %v572
    %v579 = vsel %vm177, %v538, 0
    %v582 = vsel %vm177, %v539, 0
    %584 = vmatprep.subr.mxu0 %v541
    %585 = vmatpush1.msra.mxu0 %v540
    %586 = vmatprep.subr.mxu0 %v545
    %587 = vmatpush1.msra.mxu0 %v544
    %588 = vmatprep.subr.mxu0 %v549
    %589 = vmatpush1.msra.mxu0 %v548
    %590 = vmatprep.subr.mxu0 %v553
    %591 = vmatpush1.msra.mxu0 %v552
    %592 = vmatprep.subr.mxu0 0.0
    %593 = vmatpush1.msra.mxu0 0.0
    %594 = vmatprep.subr.mxu0 0.0
    %595 = vmatpush1.msra.mxu0 0.0
    %596 = vmatprep.subr.mxu0 0.0
    %597 = vmatpush1.msra.mxu0 0.0
    %598 = vmatprep.subr.mxu0 0.0
    %599 = vmatpush1.msra.mxu0 0.0
    %600 = vmatprep.subr.mxu0 0.0
    %601 = vmatpush1.msra.mxu0 0.0
    %602 = vmatprep.subr.mxu0 0.0
    %603 = vmatpush1.msra.mxu0 0.0
    %604 = vmatprep.subr.mxu0 0.0
    %605 = vmatpush1.msra.mxu0 0.0
    %606 = vmatprep.subr.mxu0 0.0
    %607 = vmatpush1.msra.mxu0 0.0
    %608 = vmatprep.subr.mxu0 0.0
    %609 = vmatpush1.msra.mxu0 0.0
    %610 = vmatprep.subr.mxu0 0.0
    %611 = vmatpush1.msra.mxu0 0.0
    %612 = vmatprep.subr.mxu0 0.0
    %613 = vmatpush1.msra.mxu0 0.0
    %614 = vmatprep.subr.mxu0 0.0
    %615 = vmatpush1.msra.mxu0 0.0
    %616 = vmatprep.subr.mxu0 0.0
    %617 = vmatpush1.msra.mxu0 0.0
    %618 = vmatprep.subr.mxu0 0.0
    %619 = vmatpush1.msra.mxu0 0.0
    %620 = vmatprep.subr.mxu0 0.0
    %621 = vmatpush1.msra.mxu0 0.0
    %622 = vmatprep.subr.mxu0 0.0
    %623 = vmatpush1.msra.mxu0 0.0
    %624 = vmatprep.subr.mxu0 0.0
    %625 = vmatpush1.msra.mxu0 0.0
    %626 = vmatprep.subr.mxu0 0.0
    %627 = vmatpush1.msra.mxu0 0.0
    %628 = vmatprep.subr.mxu0 0.0
    %629 = vmatpush1.msra.mxu0 0.0
    %630 = vmatprep.subr.mxu0 0.0
    %631 = vmatpush1.msra.mxu0 0.0
    %632 = vmatprep.subr.mxu0 0.0
    %633 = vmatpush1.msra.mxu0 0.0
    %634 = vmatprep.subr.mxu0 0.0
    %635 = vmatpush1.msra.mxu0 0.0
    %636 = vmatprep.subr.mxu0 0.0
    %637 = vmatpush1.msra.mxu0 0.0
    %638 = vmatprep.subr.mxu0 0.0
    %639 = vmatpush1.msra.mxu0 0.0
    %640 = vmatprep.subr.mxu0 0.0
    %641 = vmatpush1.msra.mxu0 0.0
    %642 = vmatprep.subr.mxu0 0.0
    %643 = vmatpush1.msra.mxu0 0.0
    %644 = vmatprep.subr.mxu0 0.0
    %645 = vmatpush1.msra.mxu0 0.0
    %646 = vmatprep.subr.mxu0 0.0
    %647 = vmatpush1.msra.mxu0 0.0
    %648 = vmatprep.mubr.f32.mxu0 0.0
    %649 = vmatmul.mubr.f32.gmra.mrb[0].mxu0 %v579
    %v650 = vpop.f32.mrb[0].mxu0
    %v651 = vadd.f32 %v561, %v650
    %v652 = vpop.f32.mrb[0].mxu0
    %v653 = vadd.f32 %v565, %v652
    %654 = vmatprep.mubr.f32.mxu0 0.0
    %655 = vmatmul.mubr.f32.gmra.mrb[0].mxu0 %v582
    %v656 = vpop.f32.mrb[0].mxu0
    %v657 = vadd.f32 %v561, %v656
    %v658 = vpop.f32.mrb[0].mxu0
    %v659 = vadd.f32 %v565, %v658
    %660 = vdwg.mxu0
    %661 = vmatprep.subr.mxu0 %v543
    %662 = vmatpush1.msra.mxu0 %v542
    %663 = vmatprep.subr.mxu0 %v547
    %664 = vmatpush1.msra.mxu0 %v546
    %665 = vmatprep.subr.mxu0 %v551
    %666 = vmatpush1.msra.mxu0 %v550
    %667 = vmatprep.subr.mxu0 %v555
    %668 = vmatpush1.msra.mxu0 %v554
    %669 = vmatprep.subr.mxu0 0.0
    %670 = vmatpush1.msra.mxu0 0.0
    %671 = vmatprep.subr.mxu0 0.0
    %672 = vmatpush1.msra.mxu0 0.0
    %673 = vmatprep.subr.mxu0 0.0
    %674 = vmatpush1.msra.mxu0 0.0
    %675 = vmatprep.subr.mxu0 0.0
    %676 = vmatpush1.msra.mxu0 0.0
    %677 = vmatprep.subr.mxu0 0.0
    %678 = vmatpush1.msra.mxu0 0.0
    %679 = vmatprep.subr.mxu0 0.0
    %680 = vmatpush1.msra.mxu0 0.0
    %681 = vmatprep.subr.mxu0 0.0
    %682 = vmatpush1.msra.mxu0 0.0
    %683 = vmatprep.subr.mxu0 0.0
    %684 = vmatpush1.msra.mxu0 0.0
    %685 = vmatprep.subr.mxu0 0.0
    %686 = vmatpush1.msra.mxu0 0.0
    %687 = vmatprep.subr.mxu0 0.0
    %688 = vmatpush1.msra.mxu0 0.0
    %689 = vmatprep.subr.mxu0 0.0
    %690 = vmatpush1.msra.mxu0 0.0
    %691 = vmatprep.subr.mxu0 0.0
    %692 = vmatpush1.msra.mxu0 0.0
    %693 = vmatprep.subr.mxu0 0.0
    %694 = vmatpush1.msra.mxu0 0.0
    %695 = vmatprep.subr.mxu0 0.0
    %696 = vmatpush1.msra.mxu0 0.0
    %697 = vmatprep.subr.mxu0 0.0
    %698 = vmatpush1.msra.mxu0 0.0
    %699 = vmatprep.subr.mxu0 0.0
    %700 = vmatpush1.msra.mxu0 0.0
    %701 = vmatprep.subr.mxu0 0.0
    %702 = vmatpush1.msra.mxu0 0.0
    %703 = vmatprep.subr.mxu0 0.0
    %704 = vmatpush1.msra.mxu0 0.0
    %705 = vmatprep.subr.mxu0 0.0
    %706 = vmatpush1.msra.mxu0 0.0
    %707 = vmatprep.subr.mxu0 0.0
    %708 = vmatpush1.msra.mxu0 0.0
    %709 = vmatprep.subr.mxu0 0.0
    %710 = vmatpush1.msra.mxu0 0.0
    %711 = vmatprep.subr.mxu0 0.0
    %712 = vmatpush1.msra.mxu0 0.0
    %713 = vmatprep.subr.mxu0 0.0
    %714 = vmatpush1.msra.mxu0 0.0
    %715 = vmatprep.subr.mxu0 0.0
    %716 = vmatpush1.msra.mxu0 0.0
    %717 = vmatprep.subr.mxu0 0.0
    %718 = vmatpush1.msra.mxu0 0.0
    %719 = vmatprep.subr.mxu0 0.0
    %720 = vmatpush1.msra.mxu0 0.0
    %721 = vmatprep.subr.mxu0 0.0
    %722 = vmatpush1.msra.mxu0 0.0
    %723 = vmatprep.subr.mxu0 0.0
    %724 = vmatpush1.msra.mxu0 0.0
    %725 = vmatprep.mubr.f32.mxu0 0.0
    %726 = vmatmul.mubr.f32.gmra.mrb[0].mxu0 %v579
    %v727 = vpop.f32.mrb[0].mxu0
    %v728 = vadd.f32 %v569, %v727
    %v729 = vpop.f32.mrb[0].mxu0
    %v730 = vadd.f32 %v573, %v729
    %731 = vmatprep.mubr.f32.mxu0 0.0
    %732 = vmatmul.mubr.f32.gmra.mrb[0].mxu0 %v582
    %v733 = vpop.f32.mrb[0].mxu0
    %v734 = vadd.f32 %v569, %v733
    %v735 = vpop.f32.mrb[0].mxu0
    %v736 = vadd.f32 %v573, %v735
    %737 = vdwg.mxu0
    %v738 = vld [vmem:[#allocation13] sm:$0xff]
    %v739 = vld [vmem:[#allocation13 + $0x8] sm:$0xff]
    %v740 = vld [vmem:[#allocation13 + $0x10] sm:$0xff]
    %v741 = vld [vmem:[#allocation13 + $0x18] sm:$0xff]
    %v742 = vld [vmem:[#allocation13 + $0x20] sm:$0xff]
    %v743 = vld [vmem:[#allocation13 + $0x28] sm:$0xff]
    %v744 = vld [vmem:[#allocation13 + $0x30] sm:$0xff]
    %v745 = vld [vmem:[#allocation13 + $0x38] sm:$0xff]
    %v746 = vld [vmem:[#allocation13 + $0x40] sm:$0xff]
    %v747 = vld [vmem:[#allocation13 + $0x48] sm:$0xff]
    %v748 = vld [vmem:[#allocation13 + $0x50] sm:$0xff]
    %v749 = vld [vmem:[#allocation13 + $0x58] sm:$0xff]
    %v750 = vld [vmem:[#allocation13 + $0x60] sm:$0xff]
    %v751 = vld [vmem:[#allocation13 + $0x68] sm:$0xff]
    %v752 = vld [vmem:[#allocation13 + $0x70] sm:$0xff]
    %v753 = vld [vmem:[#allocation13 + $0x78] sm:$0xff]
    %v754 = vld [vmem:[#allocation13 + $0x80] sm:$0xff]
    %v755 = vld [vmem:[#allocation13 + $0x88] sm:$0xff]
    %v756 = vld [vmem:[#allocation13 + $0x90] sm:$0xff]
    %v757 = vld [vmem:[#allocation13 + $0x98] sm:$0xff]
    %v758 = vld [vmem:[#allocation13 + $0xa0] sm:$0xff]
    %v759 = vld [vmem:[#allocation13 + $0xa8] sm:$0xff]
    %v760 = vld [vmem:[#allocation13 + $0xb0] sm:$0xff]
    %v761 = vld [vmem:[#allocation13 + $0xb8] sm:$0xff]
    %v762 = vld [vmem:[#allocation13 + $0xc0] sm:$0xff]
    %v763 = vld [vmem:[#allocation13 + $0xc8] sm:$0xff]
    %v764 = vld [vmem:[#allocation13 + $0xd0] sm:$0xff]
    %v765 = vld [vmem:[#allocation13 + $0xd8] sm:$0xff]
    %v766 = vld [vmem:[#allocation13 + $0xe0] sm:$0xff]
    %v767 = vld [vmem:[#allocation13 + $0xe8] sm:$0xff]
    %v768 = vld [vmem:[#allocation13 + $0xf0] sm:$0xff]
    %v769 = vld [vmem:[#allocation13 + $0xf8] sm:$0xff]
    %v770 = vld [vmem:[#allocation13 + $0x100] sm:$0xff]
    %v771 = vld [vmem:[#allocation13 + $0x108] sm:$0xff]
    %v772 = vld [vmem:[#allocation13 + $0x110] sm:$0xff]
    %v773 = vld [vmem:[#allocation13 + $0x118] sm:$0xff]
    %v774 = vld [vmem:[#allocation13 + $0x120] sm:$0xff]
    %v775 = vld [vmem:[#allocation13 + $0x128] sm:$0xff]
    %v776 = vld [vmem:[#allocation13 + $0x130] sm:$0xff]
    %v777 = vld [vmem:[#allocation13 + $0x138] sm:$0xff]
    %v778 = vld [vmem:[#allocation13 + $0x140] sm:$0xff]
    %v779 = vld [vmem:[#allocation13 + $0x148] sm:$0xff]
    %v780 = vld [vmem:[#allocation13 + $0x150] sm:$0xff]
    %v781 = vld [vmem:[#allocation13 + $0x158] sm:$0xff]
    %v782 = vld [vmem:[#allocation13 + $0x160] sm:$0xff]
    %v783 = vld [vmem:[#allocation13 + $0x168] sm:$0xff]
    %v784 = vld [vmem:[#allocation13 + $0x170] sm:$0xff]
    %v785 = vld [vmem:[#allocation13 + $0x178] sm:$0xff]
    %v786 = vld [vmem:[#allocation13 + $0x180] sm:$0xff]
    %v787 = vld [vmem:[#allocation13 + $0x188] sm:$0xff]
    %v788 = vld [vmem:[#allocation13 + $0x190] sm:$0xff]
    %v789 = vld [vmem:[#allocation13 + $0x198] sm:$0xff]
    %v790 = vld [vmem:[#allocation13 + $0x1a0] sm:$0xff]
    %v791 = vld [vmem:[#allocation13 + $0x1a8] sm:$0xff]
    %v792 = vld [vmem:[#allocation13 + $0x1b0] sm:$0xff]
    %v793 = vld [vmem:[#allocation13 + $0x1b8] sm:$0xff]
    %v794 = vld [vmem:[#allocation13 + $0x1c0] sm:$0xff]
    %v795 = vld [vmem:[#allocation13 + $0x1c8] sm:$0xff]
    %v796 = vld [vmem:[#allocation13 + $0x1d0] sm:$0xff]
    %v797 = vld [vmem:[#allocation13 + $0x1d8] sm:$0xff]
    %v798 = vld [vmem:[#allocation13 + $0x1e0] sm:$0xff]
    %v799 = vld [vmem:[#allocation13 + $0x1e8] sm:$0xff]
    %v800 = vld [vmem:[#allocation13 + $0x1f0] sm:$0xff]
    %v801 = vld [vmem:[#allocation13 + $0x1f8] sm:$0xff]
    %v802 = vld [vmem:[%s11] sm:$0xff]
    %v803 = vld [vmem:[%s11 + $0x8] sm:$0xff]
    %804 = vmatprep.subr.mxu0 0.0
    %805 = vmatpush1.xpose.msra.mxu0 %v451
    %806 = vmatprep.subr.mxu0 0.0
    %807 = vmatpush1.xpose.msra.mxu0 %v457
    %808 = vmatprep.subr.mxu0 0.0
    %809 = vmatpush1.xpose.msra.mxu0 0.0
    %810 = vmatprep.subr.mxu0 0.0
    %811 = vmatpush1.xpose.msra.mxu0 0.0
    %812 = vmatprep.subr.mxu0 0.0
    %813 = vmatpush1.xpose.msra.mxu0 0.0
    %814 = vmatprep.subr.mxu0 0.0
    %815 = vmatpush1.xpose.msra.mxu0 0.0
    %816 = vmatprep.subr.mxu0 0.0
    %817 = vmatpush1.xpose.msra.mxu0 0.0
    %818 = vmatprep.subr.mxu0 0.0
    %819 = vmatpush1.xpose.msra.mxu0 0.0
    %820 = vmatprep.subr.mxu0 0.0
    %821 = vmatpush1.xpose.msra.mxu0 0.0
    %822 = vmatprep.subr.mxu0 0.0
    %823 = vmatpush1.xpose.msra.mxu0 0.0
    %824 = vmatprep.subr.mxu0 0.0
    %825 = vmatpush1.xpose.msra.mxu0 0.0
    %826 = vmatprep.subr.mxu0 0.0
    %827 = vmatpush1.xpose.msra.mxu0 0.0
    %828 = vmatprep.subr.mxu0 0.0
    %829 = vmatpush1.xpose.msra.mxu0 0.0
    %830 = vmatprep.subr.mxu0 0.0
    %831 = vmatpush1.xpose.msra.mxu0 0.0
    %832 = vmatprep.subr.mxu0 0.0
    %833 = vmatpush1.xpose.msra.mxu0 0.0
    %834 = vmatprep.subr.mxu0 0.0
    %835 = vmatpush1.xpose.msra.mxu0 0.0
    %836 = vmatprep.subr.mxu0 0.0
    %837 = vmatpush1.xpose.msra.mxu0 0.0
    %838 = vmatprep.subr.mxu0 0.0
    %839 = vmatpush1.xpose.msra.mxu0 0.0
    %840 = vmatprep.subr.mxu0 0.0
    %841 = vmatpush1.xpose.msra.mxu0 0.0
    %842 = vmatprep.subr.mxu0 0.0
    %843 = vmatpush1.xpose.msra.mxu0 0.0
    %844 = vmatprep.subr.mxu0 0.0
    %845 = vmatpush1.xpose.msra.mxu0 0.0
    %846 = vmatprep.subr.mxu0 0.0
    %847 = vmatpush1.xpose.msra.mxu0 0.0
    %848 = vmatprep.subr.mxu0 0.0
    %849 = vmatpush1.xpose.msra.mxu0 0.0
    %850 = vmatprep.subr.mxu0 0.0
    %851 = vmatpush1.xpose.msra.mxu0 0.0
    %852 = vmatprep.subr.mxu0 0.0
    %853 = vmatpush1.xpose.msra.mxu0 0.0
    %854 = vmatprep.subr.mxu0 0.0
    %855 = vmatpush1.xpose.msra.mxu0 0.0
    %856 = vmatprep.subr.mxu0 0.0
    %857 = vmatpush1.xpose.msra.mxu0 0.0
    %858 = vmatprep.subr.mxu0 0.0
    %859 = vmatpush1.xpose.msra.mxu0 0.0
    %860 = vmatprep.subr.mxu0 0.0
    %861 = vmatpush1.xpose.msra.mxu0 0.0
    %862 = vmatprep.subr.mxu0 0.0
    %863 = vmatpush1.xpose.msra.mxu0 0.0
    %864 = vmatprep.subr.mxu0 0.0
    %865 = vmatpush1.xpose.msra.mxu0 0.0
    %866 = vmatprep.subr.mxu0 0.0
    %867 = vmatpush1.xpose.msra.mxu0 0.0
    %868 = vmatprep.mubr.f32.mxu0 0.0
    %869 = vmatmul.mubr.f32.gmra.mrb[0].mxu0 %v251
    %v870 = vpop.f32.mrb[0].mxu0
    %v871 = vadd.f32 %v802, %v870
    %v872 = vpop.f32.mrb[0].mxu0
    %873 = vmatprep.mubr.f32.mxu0 0.0
    %874 = vmatmul.mubr.f32.gmra.mrb[0].mxu0 %v257
    %v875 = vpop.f32.mrb[0].mxu0
    %v876 = vadd.f32 %v803, %v875
    %v877 = vpop.f32.mrb[0].mxu0
    %878 = vdwg.mxu0
    %vm879 = vcmask 130048
    %v880 = vsel %vm879, %v871, -inf
    %881 = vmax.xlane.f32.xlu0 %v880
    %v882 = vpop.xlane.xlu0 %881
    %v883 = vsel %vm879, %v876, -inf
    %884 = vmax.xlane.f32.xlu0 %v883
    %v885 = vpop.xlane.xlu0 %884
    %v886 = vsub.f32 %v871, %v882
    %v887 = vsub.f32 %v876, %v885
    %v888 = vmul.f32 %v886, 1.442695
    %v889 = vpow.pop %v888
    %v890 = vmul.f32 %v887, 1.442695
    %v891 = vpow.pop %v890
    %v892 = vsel %vm879, %v889, 0.0
    %893 = vadd.xlane.f32.xlu0 %v892
    %v894 = vpop.xlane.xlu0 %893
    %v895 = vsel %vm879, %v891, 0.0
    %896 = vadd.xlane.f32.xlu0 %v895
    %v897 = vpop.xlane.xlu0 %896
    %v898 = vrcp.pop %v894
    %v899 = vrcp.pop %v897
    %v900 = vmul.f32 %v889, %v898
    %v901 = vmul.f32 %v891, %v899
    %v903 = vsel %vm879, %v900, 0
    %v906 = vsel %vm879, %v901, 0
    %908 = vmatprep.subr.mxu0 0.0
    %909 = vmatpush1.msra.mxu0 %v651
    %910 = vmatprep.subr.mxu0 0.0
    %911 = vmatpush1.msra.mxu0 %v657
    %912 = vmatprep.subr.mxu0 0.0
    %913 = vmatpush1.msra.mxu0 0.0
    %914 = vmatprep.subr.mxu0 0.0
    %915 = vmatpush1.msra.mxu0 0.0
    %916 = vmatprep.subr.mxu0 0.0
    %917 = vmatpush1.msra.mxu0 0.0
    %918 = vmatprep.subr.mxu0 0.0
    %919 = vmatpush1.msra.mxu0 0.0
    %920 = vmatprep.subr.mxu0 0.0
    %921 = vmatpush1.msra.mxu0 0.0
    %922 = vmatprep.subr.mxu0 0.0
    %923 = vmatpush1.msra.mxu0 0.0
    %924 = vmatprep.subr.mxu0 0.0
    %925 = vmatpush1.msra.mxu0 0.0
    %926 = vmatprep.subr.mxu0 0.0
    %927 = vmatpush1.msra.mxu0 0.0
    %928 = vmatprep.subr.mxu0 0.0
    %929 = vmatpush1.msra.mxu0 0.0
    %930 = vmatprep.subr.mxu0 0.0
    %931 = vmatpush1.msra.mxu0 0.0
    %932 = vmatprep.subr.mxu0 0.0
    %933 = vmatpush1.msra.mxu0 0.0
    %934 = vmatprep.subr.mxu0 0.0
    %935 = vmatpush1.msra.mxu0 0.0
    %936 = vmatprep.subr.mxu0 0.0
    %937 = vmatpush1.msra.mxu0 0.0
    %938 = vmatprep.subr.mxu0 0.0
    %939 = vmatpush1.msra.mxu0 0.0
    %940 = vmatprep.subr.mxu0 0.0
    %941 = vmatpush1.msra.mxu0 0.0
    %942 = vmatprep.subr.mxu0 0.0
    %943 = vmatpush1.msra.mxu0 0.0
    %944 = vmatprep.subr.mxu0 0.0
    %945 = vmatpush1.msra.mxu0 0.0
    %946 = vmatprep.subr.mxu0 0.0
    %947 = vmatpush1.msra.mxu0 0.0
    %948 = vmatprep.subr.mxu0 0.0
    %949 = vmatpush1.msra.mxu0 0.0
    %950 = vmatprep.subr.mxu0 0.0
    %951 = vmatpush1.msra.mxu0 0.0
    %952 = vmatprep.subr.mxu0 0.0
    %953 = vmatpush1.msra.mxu0 0.0
    %954 = vmatprep.subr.mxu0 0.0
    %955 = vmatpush1.msra.mxu0 0.0
    %956 = vmatprep.subr.mxu0 0.0
    %957 = vmatpush1.msra.mxu0 0.0
    %958 = vmatprep.subr.mxu0 0.0
    %959 = vmatpush1.msra.mxu0 0.0
    %960 = vmatprep.subr.mxu0 0.0
    %961 = vmatpush1.msra.mxu0 0.0
    %962 = vmatprep.subr.mxu0 0.0
    %963 = vmatpush1.msra.mxu0 0.0
    %964 = vmatprep.subr.mxu0 0.0
    %965 = vmatpush1.msra.mxu0 0.0
    %966 = vmatprep.subr.mxu0 0.0
    %967 = vmatpush1.msra.mxu0 0.0
    %968 = vmatprep.subr.mxu0 0.0
    %969 = vmatpush1.msra.mxu0 0.0
    %970 = vmatprep.subr.mxu0 0.0
    %971 = vmatpush1.msra.mxu0 0.0
    %972 = vmatprep.mubr.f32.mxu0 0.0
    %973 = vmatmul.mubr.f32.gmra.mrb[0].mxu0 %v903
    %v974 = vpop.f32.mrb[0].mxu0
    %v975 = vadd.f32 0.0, %v974
    %v976 = vpop.f32.mrb[0].mxu0
    %977 = vmatprep.mubr.f32.mxu0 0.0
    %978 = vmatmul.mubr.f32.gmra.mrb[0].mxu0 %v906
    %v979 = vpop.f32.mrb[0].mxu0
    %v980 = vadd.f32 0.0, %v979
    %v981 = vpop.f32.mrb[0].mxu0
    %982 = vdwg.mxu0
    %983 = vmatprep.subr.mxu0 0.0
    %984 = vmatpush1.xpose.msra.mxu0 %v453
    %985 = vmatprep.subr.mxu0 0.0
    %986 = vmatpush1.xpose.msra.mxu0 %v459
    %987 = vmatprep.subr.mxu0 0.0
    %988 = vmatpush1.xpose.msra.mxu0 0.0
    %989 = vmatprep.subr.mxu0 0.0
    %990 = vmatpush1.xpose.msra.mxu0 0.0
    %991 = vmatprep.subr.mxu0 0.0
    %992 = vmatpush1.xpose.msra.mxu0 0.0
    %993 = vmatprep.subr.mxu0 0.0
    %994 = vmatpush1.xpose.msra.mxu0 0.0
    %995 = vmatprep.subr.mxu0 0.0
    %996 = vmatpush1.xpose.msra.mxu0 0.0
    %997 = vmatprep.subr.mxu0 0.0
    %998 = vmatpush1.xpose.msra.mxu0 0.0
    %999 = vmatprep.subr.mxu0 0.0
    %1000 = vmatpush1.xpose.msra.mxu0 0.0
    %1001 = vmatprep.subr.mxu0 0.0
    %1002 = vmatpush1.xpose.msra.mxu0 0.0
    %1003 = vmatprep.subr.mxu0 0.0
    %1004 = vmatpush1.xpose.msra.mxu0 0.0
    %1005 = vmatprep.subr.mxu0 0.0
    %1006 = vmatpush1.xpose.msra.mxu0 0.0
    %1007 = vmatprep.subr.mxu0 0.0
    %1008 = vmatpush1.xpose.msra.mxu0 0.0
    %1009 = vmatprep.subr.mxu0 0.0
    %1010 = vmatpush1.xpose.msra.mxu0 0.0
    %1011 = vmatprep.subr.mxu0 0.0
    %1012 = vmatpush1.xpose.msra.mxu0 0.0
    %1013 = vmatprep.subr.mxu0 0.0
    %1014 = vmatpush1.xpose.msra.mxu0 0.0
    %1015 = vmatprep.subr.mxu0 0.0
    %1016 = vmatpush1.xpose.msra.mxu0 0.0
    %1017 = vmatprep.subr.mxu0 0.0
    %1018 = vmatpush1.xpose.msra.mxu0 0.0
    %1019 = vmatprep.subr.mxu0 0.0
    %1020 = vmatpush1.xpose.msra.mxu0 0.0
    %1021 = vmatprep.subr.mxu0 0.0
    %1022 = vmatpush1.xpose.msra.mxu0 0.0
    %1023 = vmatprep.subr.mxu0 0.0
    %1024 = vmatpush1.xpose.msra.mxu0 0.0
    %1025 = vmatprep.subr.mxu0 0.0
    %1026 = vmatpush1.xpose.msra.mxu0 0.0
    %1027 = vmatprep.subr.mxu0 0.0
    %1028 = vmatpush1.xpose.msra.mxu0 0.0
    %1029 = vmatprep.subr.mxu0 0.0
    %1030 = vmatpush1.xpose.msra.mxu0 0.0
    %1031 = vmatprep.subr.mxu0 0.0
    %1032 = vmatpush1.xpose.msra.mxu0 0.0
    %1033 = vmatprep.subr.mxu0 0.0
    %1034 = vmatpush1.xpose.msra.mxu0 0.0
    %1035 = vmatprep.subr.mxu0 0.0
    %1036 = vmatpush1.xpose.msra.mxu0 0.0
    %1037 = vmatprep.subr.mxu0 0.0
    %1038 = vmatpush1.xpose.msra.mxu0 0.0
    %1039 = vmatprep.subr.mxu0 0.0
    %1040 = vmatpush1.xpose.msra.mxu0 0.0
    %1041 = vmatprep.subr.mxu0 0.0
    %1042 = vmatpush1.xpose.msra.mxu0 0.0
    %1043 = vmatprep.subr.mxu0 0.0
    %1044 = vmatpush1.xpose.msra.mxu0 0.0
    %1045 = vmatprep.subr.mxu0 0.0
    %1046 = vmatpush1.xpose.msra.mxu0 0.0
    %1047 = vmatprep.mubr.f32.mxu0 0.0
    %1048 = vmatmul.mubr.f32.gmra.mrb[0].mxu0 %v253
    %v1049 = vpop.f32.mrb[0].mxu0
    %v1050 = vadd.f32 %v802, %v1049
    %v1051 = vpop.f32.mrb[0].mxu0
    %1052 = vmatprep.mubr.f32.mxu0 0.0
    %1053 = vmatmul.mubr.f32.gmra.mrb[0].mxu0 %v259
    %v1054 = vpop.f32.mrb[0].mxu0
    %v1055 = vadd.f32 %v803, %v1054
    %v1056 = vpop.f32.mrb[0].mxu0
    %1057 = vdwg.mxu0
    %v1058 = vsel %vm879, %v1050, -inf
    %1059 = vmax.xlane.f32.xlu0 %v1058
    %v1060 = vpop.xlane.xlu0 %1059
    %v1061 = vsel %vm879, %v1055, -inf
    %1062 = vmax.xlane.f32.xlu0 %v1061
    %v1063 = vpop.xlane.xlu0 %1062
    %v1064 = vsub.f32 %v1050, %v1060
    %v1065 = vsub.f32 %v1055, %v1063
    %v1066 = vmul.f32 %v1064, 1.442695
    %v1067 = vpow.pop %v1066
    %v1068 = vmul.f32 %v1065, 1.442695
    %v1069 = vpow.pop %v1068
    %v1070 = vsel %vm879, %v1067, 0.0
    %1071 = vadd.xlane.f32.xlu0 %v1070
    %v1072 = vpop.xlane.xlu0 %1071
    %v1073 = vsel %vm879, %v1069, 0.0
    %1074 = vadd.xlane.f32.xlu0 %v1073
    %v1075 = vpop.xlane.xlu0 %1074
    %v1076 = vrcp.pop %v1072
    %v1077 = vrcp.pop %v1075
    %v1078 = vmul.f32 %v1067, %v1076
    %v1079 = vmul.f32 %v1069, %v1077
    %v1081 = vsel %vm879, %v1078, 0
    %v1084 = vsel %vm879, %v1079, 0
    %1086 = vmatprep.subr.mxu0 0.0
    %1087 = vmatpush1.msra.mxu0 %v653
    %1088 = vmatprep.subr.mxu0 0.0
    %1089 = vmatpush1.msra.mxu0 %v659
    %1090 = vmatprep.subr.mxu0 0.0
    %1091 = vmatpush1.msra.mxu0 0.0
    %1092 = vmatprep.subr.mxu0 0.0
    %1093 = vmatpush1.msra.mxu0 0.0
    %1094 = vmatprep.subr.mxu0 0.0
    %1095 = vmatpush1.msra.mxu0 0.0
    %1096 = vmatprep.subr.mxu0 0.0
    %1097 = vmatpush1.msra.mxu0 0.0
    %1098 = vmatprep.subr.mxu0 0.0
    %1099 = vmatpush1.msra.mxu0 0.0
    %1100 = vmatprep.subr.mxu0 0.0
    %1101 = vmatpush1.msra.mxu0 0.0
    %1102 = vmatprep.subr.mxu0 0.0
    %1103 = vmatpush1.msra.mxu0 0.0
    %1104 = vmatprep.subr.mxu0 0.0
    %1105 = vmatpush1.msra.mxu0 0.0
    %1106 = vmatprep.subr.mxu0 0.0
    %1107 = vmatpush1.msra.mxu0 0.0
    %1108 = vmatprep.subr.mxu0 0.0
    %1109 = vmatpush1.msra.mxu0 0.0
    %1110 = vmatprep.subr.mxu0 0.0
    %1111 = vmatpush1.msra.mxu0 0.0
    %1112 = vmatprep.subr.mxu0 0.0
    %1113 = vmatpush1.msra.mxu0 0.0
    %1114 = vmatprep.subr.mxu0 0.0
    %1115 = vmatpush1.msra.mxu0 0.0
    %1116 = vmatprep.subr.mxu0 0.0
    %1117 = vmatpush1.msra.mxu0 0.0
    %1118 = vmatprep.subr.mxu0 0.0
    %1119 = vmatpush1.msra.mxu0 0.0
    %1120 = vmatprep.subr.mxu0 0.0
    %1121 = vmatpush1.msra.mxu0 0.0
    %1122 = vmatprep.subr.mxu0 0.0
    %1123 = vmatpush1.msra.mxu0 0.0
    %1124 = vmatprep.subr.mxu0 0.0
    %1125 = vmatpush1.msra.mxu0 0.0
    %1126 = vmatprep.subr.mxu0 0.0
    %1127 = vmatpush1.msra.mxu0 0.0
    %1128 = vmatprep.subr.mxu0 0.0
    %1129 = vmatpush1.msra.mxu0 0.0
    %1130 = vmatprep.subr.mxu0 0.0
    %1131 = vmatpush1.msra.mxu0 0.0
    %1132 = vmatprep.subr.mxu0 0.0
    %1133 = vmatpush1.msra.mxu0 0.0
    %1134 = vmatprep.subr.mxu0 0.0
    %1135 = vmatpush1.msra.mxu0 0.0
    %1136 = vmatprep.subr.mxu0 0.0
    %1137 = vmatpush1.msra.mxu0 0.0
    %1138 = vmatprep.subr.mxu0 0.0
    %1139 = vmatpush1.msra.mxu0 0.0
    %1140 = vmatprep.subr.mxu0 0.0
    %1141 = vmatpush1.msra.mxu0 0.0
    %1142 = vmatprep.subr.mxu0 0.0
    %1143 = vmatpush1.msra.mxu0 0.0
    %1144 = vmatprep.subr.mxu0 0.0
    %1145 = vmatpush1.msra.mxu0 0.0
    %1146 = vmatprep.subr.mxu0 0.0
    %1147 = vmatpush1.msra.mxu0 0.0
    %1148 = vmatprep.subr.mxu0 0.0
    %1149 = vmatpush1.msra.mxu0 0.0
    %1150 = vmatprep.mubr.f32.mxu0 0.0
    %1151 = vmatmul.mubr.f32.gmra.mrb[0].mxu0 %v1081
    %v1152 = vpop.f32.mrb[0].mxu0
    %v1153 = vadd.f32 0.0, %v1152
    %v1154 = vpop.f32.mrb[0].mxu0
    %1155 = vmatprep.mubr.f32.mxu0 0.0
    %1156 = vmatmul.mubr.f32.gmra.mrb[0].mxu0 %v1084
    %v1157 = vpop.f32.mrb[0].mxu0
    %v1158 = vadd.f32 0.0, %v1157
    %v1159 = vpop.f32.mrb[0].mxu0
    %1160 = vdwg.mxu0
    %1161 = vmatprep.subr.mxu0 0.0
    %1162 = vmatpush1.msra.mxu0 %v754
    %1163 = vmatprep.subr.mxu0 0.0
    %1164 = vmatpush1.msra.mxu0 %v755
    %1165 = vmatprep.subr.mxu0 0.0
    %1166 = vmatpush1.msra.mxu0 %v756
    %1167 = vmatprep.subr.mxu0 0.0
    %1168 = vmatpush1.msra.mxu0 %v757
    %1169 = vmatprep.subr.mxu0 0.0
    %1170 = vmatpush1.msra.mxu0 %v758
    %1171 = vmatprep.subr.mxu0 0.0
    %1172 = vmatpush1.msra.mxu0 %v759
    %1173 = vmatprep.subr.mxu0 0.0
    %1174 = vmatpush1.msra.mxu0 %v760
    %1175 = vmatprep.subr.mxu0 0.0
    %1176 = vmatpush1.msra.mxu0 %v761
    %1177 = vmatprep.subr.mxu0 0.0
    %1178 = vmatpush1.msra.mxu0 %v762
    %1179 = vmatprep.subr.mxu0 0.0
    %1180 = vmatpush1.msra.mxu0 %v763
    %1181 = vmatprep.subr.mxu0 0.0
    %1182 = vmatpush1.msra.mxu0 %v764
    %1183 = vmatprep.subr.mxu0 0.0
    %1184 = vmatpush1.msra.mxu0 %v765
    %1185 = vmatprep.subr.mxu0 0.0
    %1186 = vmatpush1.msra.mxu0 %v766
    %1187 = vmatprep.subr.mxu0 0.0
    %1188 = vmatpush1.msra.mxu0 %v767
    %1189 = vmatprep.subr.mxu0 0.0
    %1190 = vmatpush1.msra.mxu0 %v768
    %1191 = vmatprep.subr.mxu0 0.0
    %1192 = vmatpush1.msra.mxu0 %v769
    %1193 = vmatprep.subr.mxu0 0.0
    %1194 = vmatpush1.msra.mxu0 0.0
    %1195 = vmatprep.subr.mxu0 0.0
    %1196 = vmatpush1.msra.mxu0 0.0
    %1197 = vmatprep.subr.mxu0 0.0
    %1198 = vmatpush1.msra.mxu0 0.0
    %1199 = vmatprep.subr.mxu0 0.0
    %1200 = vmatpush1.msra.mxu0 0.0
    %1201 = vmatprep.subr.mxu0 0.0
    %1202 = vmatpush1.msra.mxu0 0.0
    %1203 = vmatprep.subr.mxu0 0.0
    %1204 = vmatpush1.msra.mxu0 0.0
    %1205 = vmatprep.subr.mxu0 0.0
    %1206 = vmatpush1.msra.mxu0 0.0
    %1207 = vmatprep.subr.mxu0 0.0
    %1208 = vmatpush1.msra.mxu0 0.0
    %1209 = vmatprep.subr.mxu0 0.0
    %1210 = vmatpush1.msra.mxu0 0.0
    %1211 = vmatprep.subr.mxu0 0.0
    %1212 = vmatpush1.msra.mxu0 0.0
    %1213 = vmatprep.subr.mxu0 0.0
    %1214 = vmatpush1.msra.mxu0 0.0
    %1215 = vmatprep.subr.mxu0 0.0
    %1216 = vmatpush1.msra.mxu0 0.0
    %1217 = vmatprep.subr.mxu0 0.0
    %1218 = vmatpush1.msra.mxu0 0.0
    %1219 = vmatprep.subr.mxu0 0.0
    %1220 = vmatpush1.msra.mxu0 0.0
    %1221 = vmatprep.subr.mxu0 0.0
    %1222 = vmatpush1.msra.mxu0 0.0
    %1223 = vmatprep.subr.mxu0 0.0
    %1224 = vmatpush1.msra.mxu0 0.0
    %1225 = vmatprep.mubr.f32.mxu0 0.0
    %1226 = vmatmul.mubr.f32.gmra.mrb[0].mxu0 %v1153
    %v1227 = vpop.f32.mrb[0].mxu0
    %v1228 = vadd.f32 0.0, %v1227
    %v1229 = vpop.f32.mrb[0].mxu0
    %1230 = vmatprep.mubr.f32.mxu0 0.0
    %1231 = vmatmul.mubr.f32.gmra.mrb[0].mxu0 %v1158
    %v1232 = vpop.f32.mrb[0].mxu0
    %v1233 = vadd.f32 0.0, %v1232
    %v1234 = vpop.f32.mrb[0].mxu0
    %1235 = vdwg.mxu0
    %1236 = vmatprep.subr.mxu0 0.0
    %1237 = vmatpush1.msra.mxu0 %v738
    %1238 = vmatprep.subr.mxu0 0.0
    %1239 = vmatpush1.msra.mxu0 %v739
    %1240 = vmatprep.subr.mxu0 0.0
    %1241 = vmatpush1.msra.mxu0 %v740
    %1242 = vmatprep.subr.mxu0 0.0
    %1243 = vmatpush1.msra.mxu0 %v741
    %1244 = vmatprep.subr.mxu0 0.0
    %1245 = vmatpush1.msra.mxu0 %v742
    %1246 = vmatprep.subr.mxu0 0.0
    %1247 = vmatpush1.msra.mxu0 %v743
    %1248 = vmatprep.subr.mxu0 0.0
    %1249 = vmatpush1.msra.mxu0 %v744
    %1250 = vmatprep.subr.mxu0 0.0
    %1251 = vmatpush1.msra.mxu0 %v745
    %1252 = vmatprep.subr.mxu0 0.0
    %1253 = vmatpush1.msra.mxu0 %v746
    %1254 = vmatprep.subr.mxu0 0.0
    %1255 = vmatpush1.msra.mxu0 %v747
    %1256 = vmatprep.subr.mxu0 0.0
    %1257 = vmatpush1.msra.mxu0 %v748
    %1258 = vmatprep.subr.mxu0 0.0
    %1259 = vmatpush1.msra.mxu0 %v749
    %1260 = vmatprep.subr.mxu0 0.0
    %1261 = vmatpush1.msra.mxu0 %v750
    %1262 = vmatprep.subr.mxu0 0.0
    %1263 = vmatpush1.msra.mxu0 %v751
    %1264 = vmatprep.subr.mxu0 0.0
    %1265 = vmatpush1.msra.mxu0 %v752
    %1266 = vmatprep.subr.mxu0 0.0
    %1267 = vmatpush1.msra.mxu0 %v753
    %1268 = vmatprep.subr.mxu0 0.0
    %1269 = vmatpush1.msra.mxu0 0.0
    %1270 = vmatprep.subr.mxu0 0.0
    %1271 = vmatpush1.msra.mxu0 0.0
    %1272 = vmatprep.subr.mxu0 0.0
    %1273 = vmatpush1.msra.mxu0 0.0
    %1274 = vmatprep.subr.mxu0 0.0
    %1275 = vmatpush1.msra.mxu0 0.0
    %1276 = vmatprep.subr.mxu0 0.0
    %1277 = vmatpush1.msra.mxu0 0.0
    %1278 = vmatprep.subr.mxu0 0.0
    %1279 = vmatpush1.msra.mxu0 0.0
    %1280 = vmatprep.subr.mxu0 0.0
    %1281 = vmatpush1.msra.mxu0 0.0
    %1282 = vmatprep.subr.mxu0 0.0
    %1283 = vmatpush1.msra.mxu0 0.0
    %1284 = vmatprep.subr.mxu0 0.0
    %1285 = vmatpush1.msra.mxu0 0.0
    %1286 = vmatprep.subr.mxu0 0.0
    %1287 = vmatpush1.msra.mxu0 0.0
    %1288 = vmatprep.subr.mxu0 0.0
    %1289 = vmatpush1.msra.mxu0 0.0
    %1290 = vmatprep.subr.mxu0 0.0
    %1291 = vmatpush1.msra.mxu0 0.0
    %1292 = vmatprep.subr.mxu0 0.0
    %1293 = vmatpush1.msra.mxu0 0.0
    %1294 = vmatprep.subr.mxu0 0.0
    %1295 = vmatpush1.msra.mxu0 0.0
    %1296 = vmatprep.subr.mxu0 0.0
    %1297 = vmatpush1.msra.mxu0 0.0
    %1298 = vmatprep.subr.mxu0 0.0
    %1299 = vmatpush1.msra.mxu0 0.0
    %1300 = vmatprep.mubr.f32.mxu0 0.0
    %1301 = vmatmul.mubr.f32.gmra.mrb[0].mxu0 %v975
    %v1302 = vpop.f32.mrb[0].mxu0
    %v1303 = vadd.f32 %v1228, %v1302
    %v1304 = vpop.f32.mrb[0].mxu0
    %1305 = vmatprep.mubr.f32.mxu0 0.0
    %1306 = vmatmul.mubr.f32.gmra.mrb[0].mxu0 %v980
    %v1307 = vpop.f32.mrb[0].mxu0
    %v1308 = vadd.f32 %v1233, %v1307
    %v1309 = vpop.f32.mrb[0].mxu0
    %1310 = vdwg.mxu0
    %1311 = vmatprep.subr.mxu0 0.0
    %1312 = vmatpush1.xpose.msra.mxu0 %v528
    %1313 = vmatprep.subr.mxu0 0.0
    %1314 = vmatpush1.xpose.msra.mxu0 %v534
    %1315 = vmatprep.subr.mxu0 0.0
    %1316 = vmatpush1.xpose.msra.mxu0 0.0
    %1317 = vmatprep.subr.mxu0 0.0
    %1318 = vmatpush1.xpose.msra.mxu0 0.0
    %1319 = vmatprep.subr.mxu0 0.0
    %1320 = vmatpush1.xpose.msra.mxu0 0.0
    %1321 = vmatprep.subr.mxu0 0.0
    %1322 = vmatpush1.xpose.msra.mxu0 0.0
    %1323 = vmatprep.subr.mxu0 0.0
    %1324 = vmatpush1.xpose.msra.mxu0 0.0
    %1325 = vmatprep.subr.mxu0 0.0
    %1326 = vmatpush1.xpose.msra.mxu0 0.0
    %1327 = vmatprep.subr.mxu0 0.0
    %1328 = vmatpush1.xpose.msra.mxu0 0.0
    %1329 = vmatprep.subr.mxu0 0.0
    %1330 = vmatpush1.xpose.msra.mxu0 0.0
    %1331 = vmatprep.subr.mxu0 0.0
    %1332 = vmatpush1.xpose.msra.mxu0 0.0
    %1333 = vmatprep.subr.mxu0 0.0
    %1334 = vmatpush1.xpose.msra.mxu0 0.0
    %1335 = vmatprep.subr.mxu0 0.0
    %1336 = vmatpush1.xpose.msra.mxu0 0.0
    %1337 = vmatprep.subr.mxu0 0.0
    %1338 = vmatpush1.xpose.msra.mxu0 0.0
    %1339 = vmatprep.subr.mxu0 0.0
    %1340 = vmatpush1.xpose.msra.mxu0 0.0
    %1341 = vmatprep.subr.mxu0 0.0
    %1342 = vmatpush1.xpose.msra.mxu0 0.0
    %1343 = vmatprep.subr.mxu0 0.0
    %1344 = vmatpush1.xpose.msra.mxu0 0.0
    %1345 = vmatprep.subr.mxu0 0.0
    %1346 = vmatpush1.xpose.msra.mxu0 0.0
    %1347 = vmatprep.subr.mxu0 0.0
    %1348 = vmatpush1.xpose.msra.mxu0 0.0
    %1349 = vmatprep.subr.mxu0 0.0
    %1350 = vmatpush1.xpose.msra.mxu0 0.0
    %1351 = vmatprep.subr.mxu0 0.0
    %1352 = vmatpush1.xpose.msra.mxu0 0.0
    %1353 = vmatprep.subr.mxu0 0.0
    %1354 = vmatpush1.xpose.msra.mxu0 0.0
    %1355 = vmatprep.subr.mxu0 0.0
    %1356 = vmatpush1.xpose.msra.mxu0 0.0
    %1357 = vmatprep.subr.mxu0 0.0
    %1358 = vmatpush1.xpose.msra.mxu0 0.0
    %1359 = vmatprep.subr.mxu0 0.0
    %1360 = vmatpush1.xpose.msra.mxu0 0.0
    %1361 = vmatprep.subr.mxu0 0.0
    %1362 = vmatpush1.xpose.msra.mxu0 0.0
    %1363 = vmatprep.subr.mxu0 0.0
    %1364 = vmatpush1.xpose.msra.mxu0 0.0
    %1365 = vmatprep.subr.mxu0 0.0
    %1366 = vmatpush1.xpose.msra.mxu0 0.0
    %1367 = vmatprep.subr.mxu0 0.0
    %1368 = vmatpush1.xpose.msra.mxu0 0.0
    %1369 = vmatprep.subr.mxu0 0.0
    %1370 = vmatpush1.xpose.msra.mxu0 0.0
    %1371 = vmatprep.subr.mxu0 0.0
    %1372 = vmatpush1.xpose.msra.mxu0 0.0
    %1373 = vmatprep.subr.mxu0 0.0
    %1374 = vmatpush1.xpose.msra.mxu0 0.0
    %1375 = vmatprep.mubr.f32.mxu0 0.0
    %1376 = vmatmul.mubr.f32.gmra.mrb[0].mxu0 %v328
    %v1377 = vpop.f32.mrb[0].mxu0
    %v1378 = vadd.f32 %v802, %v1377
    %v1379 = vpop.f32.mrb[0].mxu0
    %1380 = vmatprep.mubr.f32.mxu0 0.0
    %1381 = vmatmul.mubr.f32.gmra.mrb[0].mxu0 %v334
    %v1382 = vpop.f32.mrb[0].mxu0
    %v1383 = vadd.f32 %v803, %v1382
    %v1384 = vpop.f32.mrb[0].mxu0
    %1385 = vdwg.mxu0
    %v1386 = vsel %vm879, %v1378, -inf
    %1387 = vmax.xlane.f32.xlu0 %v1386
    %v1388 = vpop.xlane.xlu0 %1387
    %v1389 = vsel %vm879, %v1383, -inf
    %1390 = vmax.xlane.f32.xlu0 %v1389
    %v1391 = vpop.xlane.xlu0 %1390
    %v1392 = vsub.f32 %v1378, %v1388
    %v1393 = vsub.f32 %v1383, %v1391
    %v1394 = vmul.f32 %v1392, 1.442695
    %v1395 = vpow.pop %v1394
    %v1396 = vmul.f32 %v1393, 1.442695
    %v1397 = vpow.pop %v1396
    %v1398 = vsel %vm879, %v1395, 0.0
    %1399 = vadd.xlane.f32.xlu0 %v1398
    %v1400 = vpop.xlane.xlu0 %1399
    %v1401 = vsel %vm879, %v1397, 0.0
    %1402 = vadd.xlane.f32.xlu0 %v1401
    %v1403 = vpop.xlane.xlu0 %1402
    %v1404 = vrcp.pop %v1400
    %v1405 = vrcp.pop %v1403
    %v1406 = vmul.f32 %v1395, %v1404
    %v1407 = vmul.f32 %v1397, %v1405
    %v1409 = vsel %vm879, %v1406, 0
    %v1412 = vsel %vm879, %v1407, 0
    %1414 = vmatprep.subr.mxu0 0.0
    %1415 = vmatpush1.msra.mxu0 %v728
    %1416 = vmatprep.subr.mxu0 0.0
    %1417 = vmatpush1.msra.mxu0 %v734
    %1418 = vmatprep.subr.mxu0 0.0
    %1419 = vmatpush1.msra.mxu0 0.0
    %1420 = vmatprep.subr.mxu0 0.0
    %1421 = vmatpush1.msra.mxu0 0.0
    %1422 = vmatprep.subr.mxu0 0.0
    %1423 = vmatpush1.msra.mxu0 0.0
    %1424 = vmatprep.subr.mxu0 0.0
    %1425 = vmatpush1.msra.mxu0 0.0
    %1426 = vmatprep.subr.mxu0 0.0
    %1427 = vmatpush1.msra.mxu0 0.0
    %1428 = vmatprep.subr.mxu0 0.0
    %1429 = vmatpush1.msra.mxu0 0.0
    %1430 = vmatprep.subr.mxu0 0.0
    %1431 = vmatpush1.msra.mxu0 0.0
    %1432 = vmatprep.subr.mxu0 0.0
    %1433 = vmatpush1.msra.mxu0 0.0
    %1434 = vmatprep.subr.mxu0 0.0
    %1435 = vmatpush1.msra.mxu0 0.0
    %1436 = vmatprep.subr.mxu0 0.0
    %1437 = vmatpush1.msra.mxu0 0.0
    %1438 = vmatprep.subr.mxu0 0.0
    %1439 = vmatpush1.msra.mxu0 0.0
    %1440 = vmatprep.subr.mxu0 0.0
    %1441 = vmatpush1.msra.mxu0 0.0
    %1442 = vmatprep.subr.mxu0 0.0
    %1443 = vmatpush1.msra.mxu0 0.0
    %1444 = vmatprep.subr.mxu0 0.0
    %1445 = vmatpush1.msra.mxu0 0.0
    %1446 = vmatprep.subr.mxu0 0.0
    %1447 = vmatpush1.msra.mxu0 0.0
    %1448 = vmatprep.subr.mxu0 0.0
    %1449 = vmatpush1.msra.mxu0 0.0
    %1450 = vmatprep.subr.mxu0 0.0
    %1451 = vmatpush1.msra.mxu0 0.0
    %1452 = vmatprep.subr.mxu0 0.0
    %1453 = vmatpush1.msra.mxu0 0.0
    %1454 = vmatprep.subr.mxu0 0.0
    %1455 = vmatpush1.msra.mxu0 0.0
    %1456 = vmatprep.subr.mxu0 0.0
    %1457 = vmatpush1.msra.mxu0 0.0
    %1458 = vmatprep.subr.mxu0 0.0
    %1459 = vmatpush1.msra.mxu0 0.0
    %1460 = vmatprep.subr.mxu0 0.0
    %1461 = vmatpush1.msra.mxu0 0.0
    %1462 = vmatprep.subr.mxu0 0.0
    %1463 = vmatpush1.msra.mxu0 0.0
    %1464 = vmatprep.subr.mxu0 0.0
    %1465 = vmatpush1.msra.mxu0 0.0
    %1466 = vmatprep.subr.mxu0 0.0
    %1467 = vmatpush1.msra.mxu0 0.0
    %1468 = vmatprep.subr.mxu0 0.0
    %1469 = vmatpush1.msra.mxu0 0.0
    %1470 = vmatprep.subr.mxu0 0.0
    %1471 = vmatpush1.msra.mxu0 0.0
    %1472 = vmatprep.subr.mxu0 0.0
    %1473 = vmatpush1.msra.mxu0 0.0
    %1474 = vmatprep.subr.mxu0 0.0
    %1475 = vmatpush1.msra.mxu0 0.0
    %1476 = vmatprep.subr.mxu0 0.0
    %1477 = vmatpush1.msra.mxu0 0.0
    %1478 = vmatprep.mubr.f32.mxu0 0.0
    %1479 = vmatmul.mubr.f32.gmra.mrb[0].mxu0 %v1409
    %v1480 = vpop.f32.mrb[0].mxu0
    %v1481 = vadd.f32 0.0, %v1480
    %v1482 = vpop.f32.mrb[0].mxu0
    %1483 = vmatprep.mubr.f32.mxu0 0.0
    %1484 = vmatmul.mubr.f32.gmra.mrb[0].mxu0 %v1412
    %v1485 = vpop.f32.mrb[0].mxu0
    %v1486 = vadd.f32 0.0, %v1485
    %v1487 = vpop.f32.mrb[0].mxu0
    %1488 = vdwg.mxu0
    %1489 = vmatprep.subr.mxu0 0.0
    %1490 = vmatpush1.msra.mxu0 %v770
    %1491 = vmatprep.subr.mxu0 0.0
    %1492 = vmatpush1.msra.mxu0 %v771
    %1493 = vmatprep.subr.mxu0 0.0
    %1494 = vmatpush1.msra.mxu0 %v772
    %1495 = vmatprep.subr.mxu0 0.0
    %1496 = vmatpush1.msra.mxu0 %v773
    %1497 = vmatprep.subr.mxu0 0.0
    %1498 = vmatpush1.msra.mxu0 %v774
    %1499 = vmatprep.subr.mxu0 0.0
    %1500 = vmatpush1.msra.mxu0 %v775
    %1501 = vmatprep.subr.mxu0 0.0
    %1502 = vmatpush1.msra.mxu0 %v776
    %1503 = vmatprep.subr.mxu0 0.0
    %1504 = vmatpush1.msra.mxu0 %v777
    %1505 = vmatprep.subr.mxu0 0.0
    %1506 = vmatpush1.msra.mxu0 %v778
    %1507 = vmatprep.subr.mxu0 0.0
    %1508 = vmatpush1.msra.mxu0 %v779
    %1509 = vmatprep.subr.mxu0 0.0
    %1510 = vmatpush1.msra.mxu0 %v780
    %1511 = vmatprep.subr.mxu0 0.0
    %1512 = vmatpush1.msra.mxu0 %v781
    %1513 = vmatprep.subr.mxu0 0.0
    %1514 = vmatpush1.msra.mxu0 %v782
    %1515 = vmatprep.subr.mxu0 0.0
    %1516 = vmatpush1.msra.mxu0 %v783
    %1517 = vmatprep.subr.mxu0 0.0
    %1518 = vmatpush1.msra.mxu0 %v784
    %1519 = vmatprep.subr.mxu0 0.0
    %1520 = vmatpush1.msra.mxu0 %v785
    %1521 = vmatprep.subr.mxu0 0.0
    %1522 = vmatpush1.msra.mxu0 0.0
    %1523 = vmatprep.subr.mxu0 0.0
    %1524 = vmatpush1.msra.mxu0 0.0
    %1525 = vmatprep.subr.mxu0 0.0
    %1526 = vmatpush1.msra.mxu0 0.0
    %1527 = vmatprep.subr.mxu0 0.0
    %1528 = vmatpush1.msra.mxu0 0.0
    %1529 = vmatprep.subr.mxu0 0.0
    %1530 = vmatpush1.msra.mxu0 0.0
    %1531 = vmatprep.subr.mxu0 0.0
    %1532 = vmatpush1.msra.mxu0 0.0
    %1533 = vmatprep.subr.mxu0 0.0
    %1534 = vmatpush1.msra.mxu0 0.0
    %1535 = vmatprep.subr.mxu0 0.0
    %1536 = vmatpush1.msra.mxu0 0.0
    %1537 = vmatprep.subr.mxu0 0.0
    %1538 = vmatpush1.msra.mxu0 0.0
    %1539 = vmatprep.subr.mxu0 0.0
    %1540 = vmatpush1.msra.mxu0 0.0
    %1541 = vmatprep.subr.mxu0 0.0
    %1542 = vmatpush1.msra.mxu0 0.0
    %1543 = vmatprep.subr.mxu0 0.0
    %1544 = vmatpush1.msra.mxu0 0.0
    %1545 = vmatprep.subr.mxu0 0.0
    %1546 = vmatpush1.msra.mxu0 0.0
    %1547 = vmatprep.subr.mxu0 0.0
    %1548 = vmatpush1.msra.mxu0 0.0
    %1549 = vmatprep.subr.mxu0 0.0
    %1550 = vmatpush1.msra.mxu0 0.0
    %1551 = vmatprep.subr.mxu0 0.0
    %1552 = vmatpush1.msra.mxu0 0.0
    %1553 = vmatprep.mubr.f32.mxu0 0.0
    %1554 = vmatmul.mubr.f32.gmra.mrb[0].mxu0 %v1481
    %v1555 = vpop.f32.mrb[0].mxu0
    %v1556 = vadd.f32 0.0, %v1555
    %v1557 = vpop.f32.mrb[0].mxu0
    %1558 = vmatprep.mubr.f32.mxu0 0.0
    %1559 = vmatmul.mubr.f32.gmra.mrb[0].mxu0 %v1486
    %v1560 = vpop.f32.mrb[0].mxu0
    %v1561 = vadd.f32 0.0, %v1560
    %v1562 = vpop.f32.mrb[0].mxu0
    %1563 = vdwg.mxu0
    %v1564 = vadd.f32 %v1303, %v1556
    %v1565 = vadd.f32 %v1308, %v1561
    %1566 = vmatprep.subr.mxu0 0.0
    %1567 = vmatpush1.xpose.msra.mxu0 %v530
    %1568 = vmatprep.subr.mxu0 0.0
    %1569 = vmatpush1.xpose.msra.mxu0 %v536
    %1570 = vmatprep.subr.mxu0 0.0
    %1571 = vmatpush1.xpose.msra.mxu0 0.0
    %1572 = vmatprep.subr.mxu0 0.0
    %1573 = vmatpush1.xpose.msra.mxu0 0.0
    %1574 = vmatprep.subr.mxu0 0.0
    %1575 = vmatpush1.xpose.msra.mxu0 0.0
    %1576 = vmatprep.subr.mxu0 0.0
    %1577 = vmatpush1.xpose.msra.mxu0 0.0
    %1578 = vmatprep.subr.mxu0 0.0
    %1579 = vmatpush1.xpose.msra.mxu0 0.0
    %1580 = vmatprep.subr.mxu0 0.0
    %1581 = vmatpush1.xpose.msra.mxu0 0.0
    %1582 = vmatprep.subr.mxu0 0.0
    %1583 = vmatpush1.xpose.msra.mxu0 0.0
    %1584 = vmatprep.subr.mxu0 0.0
    %1585 = vmatpush1.xpose.msra.mxu0 0.0
    %1586 = vmatprep.subr.mxu0 0.0
    %1587 = vmatpush1.xpose.msra.mxu0 0.0
    %1588 = vmatprep.subr.mxu0 0.0
    %1589 = vmatpush1.xpose.msra.mxu0 0.0
    %1590 = vmatprep.subr.mxu0 0.0
    %1591 = vmatpush1.xpose.msra.mxu0 0.0
    %1592 = vmatprep.subr.mxu0 0.0
    %1593 = vmatpush1.xpose.msra.mxu0 0.0
    %1594 = vmatprep.subr.mxu0 0.0
    %1595 = vmatpush1.xpose.msra.mxu0 0.0
    %1596 = vmatprep.subr.mxu0 0.0
    %1597 = vmatpush1.xpose.msra.mxu0 0.0
    %1598 = vmatprep.subr.mxu0 0.0
    %1599 = vmatpush1.xpose.msra.mxu0 0.0
    %1600 = vmatprep.subr.mxu0 0.0
    %1601 = vmatpush1.xpose.msra.mxu0 0.0
    %1602 = vmatprep.subr.mxu0 0.0
    %1603 = vmatpush1.xpose.msra.mxu0 0.0
    %1604 = vmatprep.subr.mxu0 0.0
    %1605 = vmatpush1.xpose.msra.mxu0 0.0
    %1606 = vmatprep.subr.mxu0 0.0
    %1607 = vmatpush1.xpose.msra.mxu0 0.0
    %1608 = vmatprep.subr.mxu0 0.0
    %1609 = vmatpush1.xpose.msra.mxu0 0.0
    %1610 = vmatprep.subr.mxu0 0.0
    %1611 = vmatpush1.xpose.msra.mxu0 0.0
    %1612 = vmatprep.subr.mxu0 0.0
    %1613 = vmatpush1.xpose.msra.mxu0 0.0
    %1614 = vmatprep.subr.mxu0 0.0
    %1615 = vmatpush1.xpose.msra.mxu0 0.0
    %1616 = vmatprep.subr.mxu0 0.0
    %1617 = vmatpush1.xpose.msra.mxu0 0.0
    %1618 = vmatprep.subr.mxu0 0.0
    %1619 = vmatpush1.xpose.msra.mxu0 0.0
    %1620 = vmatprep.subr.mxu0 0.0
    %1621 = vmatpush1.xpose.msra.mxu0 0.0
    %1622 = vmatprep.subr.mxu0 0.0
    %1623 = vmatpush1.xpose.msra.mxu0 0.0
    %1624 = vmatprep.subr.mxu0 0.0
    %1625 = vmatpush1.xpose.msra.mxu0 0.0
    %1626 = vmatprep.subr.mxu0 0.0
    %1627 = vmatpush1.xpose.msra.mxu0 0.0
    %1628 = vmatprep.subr.mxu0 0.0
    %1629 = vmatpush1.xpose.msra.mxu0 0.0
    %1630 = vmatprep.mubr.f32.mxu0 0.0
    %1631 = vmatmul.mubr.f32.gmra.mrb[0].mxu0 %v330
    %v1632 = vpop.f32.mrb[0].mxu0
    %v1633 = vadd.f32 %v802, %v1632
    %v1634 = vpop.f32.mrb[0].mxu0
    %1635 = vmatprep.mubr.f32.mxu0 0.0
    %1636 = vmatmul.mubr.f32.gmra.mrb[0].mxu0 %v336
    %v1637 = vpop.f32.mrb[0].mxu0
    %v1638 = vadd.f32 %v803, %v1637
    %v1639 = vpop.f32.mrb[0].mxu0
    %1640 = vdwg.mxu0
    %v1641 = vsel %vm879, %v1633, -inf
    %1642 = vmax.xlane.f32.xlu0 %v1641
    %v1643 = vpop.xlane.xlu0 %1642
    %v1644 = vsel %vm879, %v1638, -inf
    %1645 = vmax.xlane.f32.xlu0 %v1644
    %v1646 = vpop.xlane.xlu0 %1645
    %v1647 = vsub.f32 %v1633, %v1643
    %v1648 = vsub.f32 %v1638, %v1646
    %v1649 = vmul.f32 %v1647, 1.442695
    %v1650 = vpow.pop %v1649
    %v1651 = vmul.f32 %v1648, 1.442695
    %v1652 = vpow.pop %v1651
    %v1653 = vsel %vm879, %v1650, 0.0
    %1654 = vadd.xlane.f32.xlu0 %v1653
    %v1655 = vpop.xlane.xlu0 %1654
    %v1656 = vsel %vm879, %v1652, 0.0
    %1657 = vadd.xlane.f32.xlu0 %v1656
    %v1658 = vpop.xlane.xlu0 %1657
    %v1659 = vrcp.pop %v1655
    %v1660 = vrcp.pop %v1658
    %v1661 = vmul.f32 %v1650, %v1659
    %v1662 = vmul.f32 %v1652, %v1660
    %v1664 = vsel %vm879, %v1661, 0
    %v1667 = vsel %vm879, %v1662, 0
    %1669 = vmatprep.subr.mxu0 0.0
    %1670 = vmatpush1.msra.mxu0 %v730
    %1671 = vmatprep.subr.mxu0 0.0
    %1672 = vmatpush1.msra.mxu0 %v736
    %1673 = vmatprep.subr.mxu0 0.0
    %1674 = vmatpush1.msra.mxu0 0.0
    %1675 = vmatprep.subr.mxu0 0.0
    %1676 = vmatpush1.msra.mxu0 0.0
    %1677 = vmatprep.subr.mxu0 0.0
    %1678 = vmatpush1.msra.mxu0 0.0
    %1679 = vmatprep.subr.mxu0 0.0
    %1680 = vmatpush1.msra.mxu0 0.0
    %1681 = vmatprep.subr.mxu0 0.0
    %1682 = vmatpush1.msra.mxu0 0.0
    %1683 = vmatprep.subr.mxu0 0.0
    %1684 = vmatpush1.msra.mxu0 0.0
    %1685 = vmatprep.subr.mxu0 0.0
    %1686 = vmatpush1.msra.mxu0 0.0
    %1687 = vmatprep.subr.mxu0 0.0
    %1688 = vmatpush1.msra.mxu0 0.0
    %1689 = vmatprep.subr.mxu0 0.0
    %1690 = vmatpush1.msra.mxu0 0.0
    %1691 = vmatprep.subr.mxu0 0.0
    %1692 = vmatpush1.msra.mxu0 0.0
    %1693 = vmatprep.subr.mxu0 0.0
    %1694 = vmatpush1.msra.mxu0 0.0
    %1695 = vmatprep.subr.mxu0 0.0
    %1696 = vmatpush1.msra.mxu0 0.0
    %1697 = vmatprep.subr.mxu0 0.0
    %1698 = vmatpush1.msra.mxu0 0.0
    %1699 = vmatprep.subr.mxu0 0.0
    %1700 = vmatpush1.msra.mxu0 0.0
    %1701 = vmatprep.subr.mxu0 0.0
    %1702 = vmatpush1.msra.mxu0 0.0
    %1703 = vmatprep.subr.mxu0 0.0
    %1704 = vmatpush1.msra.mxu0 0.0
    %1705 = vmatprep.subr.mxu0 0.0
    %1706 = vmatpush1.msra.mxu0 0.0
    %1707 = vmatprep.subr.mxu0 0.0
    %1708 = vmatpush1.msra.mxu0 0.0
    %1709 = vmatprep.subr.mxu0 0.0
    %1710 = vmatpush1.msra.mxu0 0.0
    %1711 = vmatprep.subr.mxu0 0.0
    %1712 = vmatpush1.msra.mxu0 0.0
    %1713 = vmatprep.subr.mxu0 0.0
    %1714 = vmatpush1.msra.mxu0 0.0
    %1715 = vmatprep.subr.mxu0 0.0
    %1716 = vmatpush1.msra.mxu0 0.0
    %1717 = vmatprep.subr.mxu0 0.0
    %1718 = vmatpush1.msra.mxu0 0.0
    %1719 = vmatprep.subr.mxu0 0.0
    %1720 = vmatpush1.msra.mxu0 0.0
    %1721 = vmatprep.subr.mxu0 0.0
    %1722 = vmatpush1.msra.mxu0 0.0
    %1723 = vmatprep.subr.mxu0 0.0
    %1724 = vmatpush1.msra.mxu0 0.0
    %1725 = vmatprep.subr.mxu0 0.0
    %1726 = vmatpush1.msra.mxu0 0.0
    %1727 = vmatprep.subr.mxu0 0.0
    %1728 = vmatpush1.msra.mxu0 0.0
    %1729 = vmatprep.subr.mxu0 0.0
    %1730 = vmatpush1.msra.mxu0 0.0
    %1731 = vmatprep.subr.mxu0 0.0
    %1732 = vmatpush1.msra.mxu0 0.0
    %1733 = vmatprep.mubr.f32.mxu0 0.0
    %1734 = vmatmul.mubr.f32.gmra.mrb[0].mxu0 %v1664
    %v1735 = vpop.f32.mrb[0].mxu0
    %v1736 = vadd.f32 0.0, %v1735
    %v1737 = vpop.f32.mrb[0].mxu0
    %1738 = vmatprep.mubr.f32.mxu0 0.0
    %1739 = vmatmul.mubr.f32.gmra.mrb[0].mxu0 %v1667
    %v1740 = vpop.f32.mrb[0].mxu0
    %v1741 = vadd.f32 0.0, %v1740
    %v1742 = vpop.f32.mrb[0].mxu0
    %1743 = vdwg.mxu0
    %1744 = vmatprep.subr.mxu0 0.0
    %1745 = vmatpush1.msra.mxu0 %v786
    %1746 = vmatprep.subr.mxu0 0.0
    %1747 = vmatpush1.msra.mxu0 %v787
    %1748 = vmatprep.subr.mxu0 0.0
    %1749 = vmatpush1.msra.mxu0 %v788
    %1750 = vmatprep.subr.mxu0 0.0
    %1751 = vmatpush1.msra.mxu0 %v789
    %1752 = vmatprep.subr.mxu0 0.0
    %1753 = vmatpush1.msra.mxu0 %v790
    %1754 = vmatprep.subr.mxu0 0.0
    %1755 = vmatpush1.msra.mxu0 %v791
    %1756 = vmatprep.subr.mxu0 0.0
    %1757 = vmatpush1.msra.mxu0 %v792
    %1758 = vmatprep.subr.mxu0 0.0
    %1759 = vmatpush1.msra.mxu0 %v793
    %1760 = vmatprep.subr.mxu0 0.0
    %1761 = vmatpush1.msra.mxu0 %v794
    %1762 = vmatprep.subr.mxu0 0.0
    %1763 = vmatpush1.msra.mxu0 %v795
    %1764 = vmatprep.subr.mxu0 0.0
    %1765 = vmatpush1.msra.mxu0 %v796
    %1766 = vmatprep.subr.mxu0 0.0
    %1767 = vmatpush1.msra.mxu0 %v797
    %1768 = vmatprep.subr.mxu0 0.0
    %1769 = vmatpush1.msra.mxu0 %v798
    %1770 = vmatprep.subr.mxu0 0.0
    %1771 = vmatpush1.msra.mxu0 %v799
    %1772 = vmatprep.subr.mxu0 0.0
    %1773 = vmatpush1.msra.mxu0 %v800
    %1774 = vmatprep.subr.mxu0 0.0
    %1775 = vmatpush1.msra.mxu0 %v801
    %1776 = vmatprep.subr.mxu0 0.0
    %1777 = vmatpush1.msra.mxu0 0.0
    %1778 = vmatprep.subr.mxu0 0.0
    %1779 = vmatpush1.msra.mxu0 0.0
    %1780 = vmatprep.subr.mxu0 0.0
    %1781 = vmatpush1.msra.mxu0 0.0
    %1782 = vmatprep.subr.mxu0 0.0
    %1783 = vmatpush1.msra.mxu0 0.0
    %1784 = vmatprep.subr.mxu0 0.0
    %1785 = vmatpush1.msra.mxu0 0.0
    %1786 = vmatprep.subr.mxu0 0.0
    %1787 = vmatpush1.msra.mxu0 0.0
    %1788 = vmatprep.subr.mxu0 0.0
    %1789 = vmatpush1.msra.mxu0 0.0
    %1790 = vmatprep.subr.mxu0 0.0
    %1791 = vmatpush1.msra.mxu0 0.0
    %1792 = vmatprep.subr.mxu0 0.0
    %1793 = vmatpush1.msra.mxu0 0.0
    %1794 = vmatprep.subr.mxu0 0.0
    %1795 = vmatpush1.msra.mxu0 0.0
    %1796 = vmatprep.subr.mxu0 0.0
    %1797 = vmatpush1.msra.mxu0 0.0
    %1798 = vmatprep.subr.mxu0 0.0
    %1799 = vmatpush1.msra.mxu0 0.0
    %1800 = vmatprep.subr.mxu0 0.0
    %1801 = vmatpush1.msra.mxu0 0.0
    %1802 = vmatprep.subr.mxu0 0.0
    %1803 = vmatpush1.msra.mxu0 0.0
    %1804 = vmatprep.subr.mxu0 0.0
    %1805 = vmatpush1.msra.mxu0 0.0
    %1806 = vmatprep.subr.mxu0 0.0
    %1807 = vmatpush1.msra.mxu0 0.0
    %1808 = vmatprep.mubr.f32.mxu0 0.0
    %1809 = vmatmul.mubr.f32.gmra.mrb[0].mxu0 %v1736
    %v1810 = vpop.f32.mrb[0].mxu0
    %v1811 = vadd.f32 0.0, %v1810
    %v1812 = vpop.f32.mrb[0].mxu0
    %1813 = vmatprep.mubr.f32.mxu0 0.0
    %1814 = vmatmul.mubr.f32.gmra.mrb[0].mxu0 %v1741
    %v1815 = vpop.f32.mrb[0].mxu0
    %v1816 = vadd.f32 0.0, %v1815
    %v1817 = vpop.f32.mrb[0].mxu0
    %1818 = vdwg.mxu0
    %v1819 = vadd.f32 %v1564, %v1811
    %v1820 = vadd.f32 %v1565, %v1816
    %v1821 = vld [vmem:[%s10] sm:$0x1]
    %v1823 = vlaneseq
    %v1824 = vshrl.u32 %v1823, 7
    %v1825 = vsub.s32 0, %v1824
    %v1826 = vrot.slane %v1821, %v1825
    %v1828 = vadd.f32 %v1819, %v1826
    %v1829 = vadd.f32 %v1820, %v1826
    %1830 = vst [vmem:[#allocation14] sm:$0xff] %v1828
    %1831 = vst [vmem:[#allocation14 + $0x8] sm:$0xff] %v1829
    // Predicated region
    $region78: #{tpu_custom_call.1} parent=1 // pred_check
      _
    $region79: #{tpu_custom_call.1} parent=1 // pred_check_branch
      %1833 = sbr.rel (0) target = $region81
    $region80: #{tpu_custom_call.1} parent=1 // pred_region
      %s1835 = ssub.s32 256, 256
      %1836 = vsyncadd [#allocation4], %s1835
      %s1837 = sshll.u32 [#allocation14], 4
      %s1838 = int_to_ptr.vmem [resolvable:$true] %s1837
      %1843 = dma.vmem_to_hbm [thread:$0]  %s1838, 256, %s12, [#allocation4], 128, 128, 8
    $region81: #{tpu_custom_call.1} parent=1 // pred_fallthru
      _
    // Predicated region
    $region82: #{tpu_custom_call.1} parent=1 // pred_check
      _
    $region83: #{tpu_custom_call.1} parent=1 // pred_check_branch
      %1845 = sbr.rel (0) target = $region85
    $region84: #{tpu_custom_call.1} parent=1 // pred_region
      %1846 = dma.done [#allocation4], 256
    $region85: #{tpu_custom_call.1} parent=1 // pred_fallthru
      _
    %1847 = vsyncpa [#allocation3], 1
    %1848 = vsyncpa [#allocation6], 1
    %1849 = vsyncpa [#allocation9], 1
    %1850 = vsyncpa [#allocation12], 1
    %1851 = vsyncpa [#allocation4], 1

</llo_original>
